<compile_context>
chip_gen: v5e
topology: v5e:2x2
jax: 0.10.0
libtpu: 0.0.40
codegen_flags: <defaults>
</compile_context>

<pallas_src>
import functools

import jax
import jax.numpy as jnp
import numpy as np
from jax import lax
from jax.experimental import pallas as pl
from jax.experimental.pallas import tpu as pltpu


MUTE_ATTRIBUTES = False  # cfg.MUTE_ATTRIBUTES
_EPS = 1e-7


# ----------------------------------------------------------------------------
# Fused Pallas kernel: one graph (= one grid step) per invocation.
# ----------------------------------------------------------------------------
def _gcn_layer_kernel(
    feat_obj_ref, feat_att_ref, feat_rel_ref,      # lane-padded features (+ ones-lane)
    map_oa_ref, map_oo_ref, maps_rel_ref,          # adjacency maps
    w_ref,                                         # fused, segment-padded weights
    out_obj_ref, out_att_ref, out_rel_ref,         # lane-dense outputs
    *, dp, mute_attributes):
    f_obj = feat_obj_ref[0]          # (N_obj, dp)
    f_att = feat_att_ref[0]          # (N_att, dp)
    f_rel = feat_rel_ref[0]          # (N_rel, dp)
    m_oa = map_oa_ref[0]             # (N_obj, N_att)
    m_oo = map_oo_ref[0]             # (N_obj, N_obj)
    m_sr = maps_rel_ref[0, 0]        # (N_obj, N_rel)  subject links
    m_or = maps_rel_ref[0, 1]        # (N_obj, N_rel)  object  links

    # ---- stage 1: one wide relu(x @ W) per source feature matrix.
    # Bias is folded into the weight (ones-lane in the features drives the
    # bias row).  Weight slices are 128-lane aligned -> free ref views.
    fc_from_obj = jnp.maximum(
        jnp.dot(f_obj, w_ref[:, 0 * dp:4 * dp],
                preferred_element_type=jnp.float32), 0.0)      # (N_obj, 4*dp)
    fc_from_rel = jnp.maximum(
        jnp.dot(f_rel, w_ref[:, 4 * dp:6 * dp],
                preferred_element_type=jnp.float32), 0.0)      # (N_rel, 2*dp)
    fc_from_att = jnp.maximum(
        jnp.dot(f_att, w_ref[:, 6 * dp:7 * dp],
                preferred_element_type=jnp.float32), 0.0)      # (N_att, dp)

    # 128-lane aligned splits of the fused stage-1 outputs (free views).
    fc_att_from_obj = fc_from_obj[:, 0 * dp:1 * dp]
    fc_obj_from_obj = fc_from_obj[:, 1 * dp:2 * dp]
    fc_rel_from_sobj = fc_from_obj[:, 2 * dp:3 * dp]
    fc_rel_from_oobj = fc_from_obj[:, 3 * dp:4 * dp]
    fc_sobj_from_rel = fc_from_rel[:, 0 * dp:1 * dp]
    fc_oobj_from_rel = fc_from_rel[:, 1 * dp:2 * dp]
    fc_obj_from_att = fc_from_att

    # ---- stage 2: degree-normalized adjacency aggregation.
    # Both degree vectors come from the untransposed map (lane-reduce for the
    # forward direction, sublane-reduce for the transposed direction); the
    # transposed aggregation contracts dim 0, so no explicit map transpose.
    def rown(m):    # rows normalized:  m / (m.sum(1) + eps)
        return m * pl.reciprocal(jnp.sum(m, axis=1, keepdims=True) + _EPS)

    def coln(m):    # cols normalized:  m / (m.sum(0) + eps)
        return m * pl.reciprocal(jnp.sum(m, axis=0, keepdims=True) + _EPS)

    def dot_t(a, b):   # a.T @ b without materializing a.T
        return lax.dot_general(a, b, (((0,), (0,)), ((), ())),
                               preferred_element_type=jnp.float32)

    dot = functools.partial(jnp.dot, preferred_element_type=jnp.float32)

    # attribute update: att <- obj
    out_att_ref[0] = f_att + dot_t(coln(m_oa), fc_att_from_obj)

    # object update: obj <- att, obj, rel(subject), rel(object)
    s_att = dot(rown(m_oa), fc_obj_from_att)
    s_obj = dot(rown(m_oo), fc_obj_from_obj)
    s_rs = dot(rown(m_sr), fc_sobj_from_rel)
    s_ro = dot(rown(m_or), fc_oobj_from_rel)
    if mute_attributes:
        out_obj_ref[0] = f_obj + (s_obj + s_rs + s_ro) * (1.0 / 3.0)
    else:
        out_obj_ref[0] = f_obj + (s_att + s_obj + s_rs + s_ro) * 0.25

    # relation update: rel <- obj(subject), obj(object)
    s_os = dot_t(coln(m_sr), fc_rel_from_sobj)
    s_oo = dot_t(coln(m_or), fc_rel_from_oobj)
    out_rel_ref[0] = f_rel + (s_os + s_oo) * 0.5


# ----------------------------------------------------------------------------
# Host-side one-time weight fusion (segment-padded, bias folded).
# ----------------------------------------------------------------------------
def _lane_pad_width(dim_obj, dim_att, dim_rel):
    # lane-dense segment width: multiple of 128 with room for the bias row.
    return -(-(max(dim_obj, dim_att, dim_rel) + 1) // 128) * 128


def fuse_params(params, dim_obj, dim_att, dim_rel):
    """Pack the 7 (weight, bias) pairs into one (dp, 7*dp) lane-aligned block.

    Segment order (lanes):  [att<-obj | obj<-obj | rel<-sobj | rel<-oobj |
                             sobj<-rel | oobj<-rel | obj<-att]
    Row `din` of each segment holds the bias; it is selected by the ones-lane
    appended to the corresponding padded feature matrix.
    """
    dp = _lane_pad_width(dim_obj, dim_att, dim_rel)

    def seg(wb, din):
        w, b = wb
        dout = w.shape[1]
        blk = jnp.zeros((dp, dp), jnp.float32)
        blk = blk.at[:din, :dout].set(w)
        blk = blk.at[din, :dout].set(b)
        return blk

    blocks = [seg(params["att_from_obj"], dim_obj),
              seg(params["obj_from_obj"], dim_obj),
              seg(params["rel_from_sobj"], dim_obj),
              seg(params["rel_from_oobj"], dim_obj),
              seg(params["sobj_from_rel"], dim_rel),
              seg(params["oobj_from_rel"], dim_rel),
              seg(params["obj_from_att"], dim_att)]
    return jnp.concatenate(blocks, axis=1)        # (dp, 7*dp)


def _pad_features(feat, dp):
    """(B, N, d) -> (B, N, dp): zero-pad lanes, ones-lane at column d."""
    b, n, d = feat.shape
    pad = jnp.zeros((b, n, dp - d), feat.dtype).at[..., 0].set(1.0)
    return jnp.concatenate([feat, pad], axis=-1)


# ----------------------------------------------------------------------------
# Wrapper: whole batch of graphs in a single pallas_call, grid=(B,).
# ----------------------------------------------------------------------------
def graph_conv_layer(w_all, feat_obj, feat_att, feat_rel,
                     map_obj_att, map_obj_obj, map_obj_rel,
                     mute_attributes=MUTE_ATTRIBUTES):
    """Fused batched _GraphConvolutionLayer forward.

    feat_obj:     (B, N_obj, dim_obj)
    feat_att:     (B, N_att, dim_att)
    feat_rel:     (B, N_rel, dim_rel)
    map_obj_att:  (B, N_obj, N_att)   float {0,1}
    map_obj_obj:  (B, N_obj, N_obj)   float {0,1}
    map_obj_rel:  (B, N_obj, N_rel, 2) float {0,1} (ch0 = subject, ch1 = object)
    """
    b, n_obj, dim_obj = feat_obj.shape
    _, n_att, dim_att = feat_att.shape
    _, n_rel, dim_rel = feat_rel.shape
    dp = _lane_pad_width(dim_obj, dim_att, dim_rel)
    assert w_all.shape == (dp, 7 * dp), "w_all must come from fuse_params()"

    feat_obj_p = _pad_features(feat_obj, dp)
    feat_att_p = _pad_features(feat_att, dp)
    feat_rel_p = _pad_features(feat_rel, dp)
    maps_rel = jnp.moveaxis(map_obj_rel, 3, 1)     # (B, 2, N_obj, N_rel)

    kernel = functools.partial(_gcn_layer_kernel, dp=dp,
                               mute_attributes=mute_attributes)

    def per_graph(*shape):
        # one graph per grid step; trailing dims are whole-array blocks
        return pl.BlockSpec((1,) + shape, lambda i: (i,) + (0,) * len(shape))

    out_obj, out_att, out_rel = pl.pallas_call(
        kernel,
        out_shape=(jax.ShapeDtypeStruct((b, n_obj, dp), jnp.float32),
                   jax.ShapeDtypeStruct((b, n_att, dp), jnp.float32),
                   jax.ShapeDtypeStruct((b, n_rel, dp), jnp.float32)),
        grid=(b,),
        in_specs=[
            per_graph(n_obj, dp), per_graph(n_att, dp), per_graph(n_rel, dp),
            per_graph(n_obj, n_att), per_graph(n_obj, n_obj),
            per_graph(2, n_obj, n_rel),
            # constant block index -> weight DMA'd once, reused every step
            pl.BlockSpec((dp, 7 * dp), lambda i: (0, 0)),
        ],
        out_specs=(per_graph(n_obj, dp), per_graph(n_att, dp),
                   per_graph(n_rel, dp)),
        compiler_params=pltpu.CompilerParams(
            dimension_semantics=("parallel",)),
    )(feat_obj_p, feat_att_p, feat_rel_p,
      map_obj_att, map_obj_obj, maps_rel, w_all)

    return (out_obj[..., :dim_obj], out_att[..., :dim_att],
            out_rel[..., :dim_rel])


# ----------------------------------------------------------------------------
# Pure-JAX reference (mirrors the PyTorch module, single graph).
# ----------------------------------------------------------------------------
def _collect_ref(source, weight, bias, adj):
    fc = jnp.maximum(source @ weight + bias, 0.0)
    c = adj @ fc
    return c / (adj.sum(axis=1, keepdims=True) + _EPS)


def graph_conv_layer_ref(params, feat_obj, feat_att, feat_rel,
                         map_obj_att, map_obj_obj, map_obj_rel,
                         mute_attributes=MUTE_ATTRIBUTES):
    map_att_obj = map_obj_att.T
    s = _collect_ref(feat_obj, *params["att_from_obj"], map_att_obj)
    feat_att_u = feat_att + s
    s_att = _collect_ref(feat_att, *params["obj_from_att"], map_obj_att)
    s_obj = _collect_ref(feat_obj, *params["obj_from_obj"], map_obj_obj)
    s_rs = _collect_ref(feat_rel, *params["sobj_from_rel"], map_obj_rel[:, :, 0])
    s_ro = _collect_ref(feat_rel, *params["oobj_from_rel"], map_obj_rel[:, :, 1])
    if mute_attributes:
        feat_obj_u = feat_obj + (s_obj + s_rs + s_ro) / 3.0
    else:
        feat_obj_u = feat_obj + (s_att + s_obj + s_rs + s_ro) / 4.0
    s_os = _collect_ref(feat_obj, *params["rel_from_sobj"], map_obj_rel[:, :, 0].T)
    s_oo = _collect_ref(feat_obj, *params["rel_from_oobj"], map_obj_rel[:, :, 1].T)
    feat_rel_u = feat_rel + (s_os + s_oo) / 2.0
    return feat_obj_u, feat_att_u, feat_rel_u


# ----------------------------------------------------------------------------
# Deterministic parameter init (normal_init std=0.01, bias=0), matching the
# _Collection_Unit shapes.  Weight stored as (din, dout) = nn.Linear.weight.T.
# ----------------------------------------------------------------------------
def init_params(key, dim_obj, dim_att, dim_rel):
    names_shapes = {
        "sobj_from_rel": (dim_rel, dim_obj),
        "oobj_from_rel": (dim_rel, dim_obj),
        "rel_from_sobj": (dim_obj, dim_rel),
        "rel_from_oobj": (dim_obj, dim_rel),
        "att_from_obj": (dim_obj, dim_att),
        "obj_from_att": (dim_att, dim_obj),
        "obj_from_obj": (dim_obj, dim_obj),
    }
    params = {}
    keys = jax.random.split(key, len(names_shapes))
    for k, (name, (din, dout)) in zip(keys, names_shapes.items()):
        w = 0.01 * jax.random.normal(k, (din, dout), dtype=jnp.float32)
        b = jnp.zeros((dout,), dtype=jnp.float32)
        params[name] = (w, b)
    return params


# ----------------------------------------------------------------------------
if __name__ == "__main__":
    key = jax.random.PRNGKey(0)
    k_param, k_fo, k_fa, k_fr, k_moa, k_moo, k_mor = jax.random.split(key, 7)

    B = 2
    N_obj, N_att, N_rel = 8, 8, 16
    dim_obj, dim_att, dim_rel = 64, 32, 48

    params = init_params(k_param, dim_obj, dim_att, dim_rel)
    w_all = fuse_params(params, dim_obj, dim_att, dim_rel)  # one-time host prep

    feat_obj = jax.random.normal(k_fo, (B, N_obj, dim_obj), dtype=jnp.float32)
    feat_att = jax.random.normal(k_fa, (B, N_att, dim_att), dtype=jnp.float32)
    feat_rel = jax.random.normal(k_fr, (B, N_rel, dim_rel), dtype=jnp.float32)

    map_obj_att = jax.random.bernoulli(k_moa, 0.5, (B, N_obj, N_att)).astype(jnp.float32)
    map_obj_obj = jax.random.bernoulli(k_moo, 0.5, (B, N_obj, N_obj)).astype(jnp.float32)
    map_obj_rel = jax.random.bernoulli(k_mor, 0.3, (B, N_obj, N_rel, 2)).astype(jnp.float32)

    fwd = jax.jit(functools.partial(graph_conv_layer, w_all))
    out_obj, out_att, out_rel = fwd(feat_obj, feat_att, feat_rel,
                                    map_obj_att, map_obj_obj, map_obj_rel)
    jax.block_until_ready((out_obj, out_att, out_rel))

    for i in range(B):
        ref_obj, ref_att, ref_rel = graph_conv_layer_ref(
            params, feat_obj[i], feat_att[i], feat_rel[i],
            map_obj_att[i], map_obj_obj[i], map_obj_rel[i])
        np.testing.assert_allclose(np.asarray(out_obj[i]), np.asarray(ref_obj),
                                   rtol=1e-5, atol=1e-5)
        np.testing.assert_allclose(np.asarray(out_att[i]), np.asarray(ref_att),
                                   rtol=1e-5, atol=1e-5)
        np.testing.assert_allclose(np.asarray(out_rel[i]), np.asarray(ref_rel),
                                   rtol=1e-5, atol=1e-5)

    print("KERNEL_OK")
</pallas_src>

<mosaic_0001>
module attributes {stable_mosaic.version = 11 : i64} {
  func.func @_gcn_layer_kernel(%arg0: i32, %arg1: memref<1x8x128xf32, #tpu.memory_space<vmem>>, %arg2: memref<1x8x128xf32, #tpu.memory_space<vmem>>, %arg3: memref<1x16x128xf32, #tpu.memory_space<vmem>>, %arg4: memref<1x8x8xf32, #tpu.memory_space<vmem>>, %arg5: memref<1x8x8xf32, #tpu.memory_space<vmem>>, %arg6: memref<1x2x8x16xf32, #tpu.memory_space<vmem>>, %arg7: memref<128x896xf32, #tpu.memory_space<vmem>>, %arg8: memref<1x8x128xf32, #tpu.memory_space<vmem>>, %arg9: memref<1x8x128xf32, #tpu.memory_space<vmem>>, %arg10: memref<1x16x128xf32, #tpu.memory_space<vmem>>) attributes {dimension_semantics = [#tpu.dimension_semantics<parallel>], iteration_bounds = array<i64: 2>, scalar_prefetch = 0 : i64, scratch_operands = 0 : i64, tpu.core_type = #tpu.core_type<tc>, window_params = [{transform_indices = @transform_0, window_bounds = array<i64: 1, 8, 128>}, {transform_indices = @transform_1, window_bounds = array<i64: 1, 8, 128>}, {transform_indices = @transform_2, window_bounds = array<i64: 1, 16, 128>}, {transform_indices = @transform_3, window_bounds = array<i64: 1, 8, 8>}, {transform_indices = @transform_4, window_bounds = array<i64: 1, 8, 8>}, {transform_indices = @transform_5, window_bounds = array<i64: 1, 2, 8, 16>}, {pipeline_mode = #tpu.pipeline_mode<synchronous>, transform_indices = @transform_6, window_bounds = array<i64: 128, 896>}, {transform_indices = @transform_7, window_bounds = array<i64: 1, 8, 128>}, {transform_indices = @transform_8, window_bounds = array<i64: 1, 8, 128>}, {transform_indices = @transform_9, window_bounds = array<i64: 1, 16, 128>}]} {
    %c0 = arith.constant 0 : index
    %c0_0 = arith.constant 0 : index
    %c0_1 = arith.constant 0 : index
    %0 = vector.load %arg1[%c0, %c0_0, %c0_1] : memref<1x8x128xf32, #tpu.memory_space<vmem>>, vector<1x8x128xf32>
    %1 = vector.shape_cast %0 : vector<1x8x128xf32> to vector<8x128xf32>
    %c0_2 = arith.constant 0 : index
    %c0_3 = arith.constant 0 : index
    %c0_4 = arith.constant 0 : index
    %2 = vector.load %arg2[%c0_2, %c0_3, %c0_4] : memref<1x8x128xf32, #tpu.memory_space<vmem>>, vector<1x8x128xf32>
    %3 = vector.shape_cast %2 : vector<1x8x128xf32> to vector<8x128xf32>
    %c0_5 = arith.constant 0 : index
    %c0_6 = arith.constant 0 : index
    %c0_7 = arith.constant 0 : index
    %4 = vector.load %arg3[%c0_5, %c0_6, %c0_7] : memref<1x16x128xf32, #tpu.memory_space<vmem>>, vector<1x16x128xf32>
    %5 = vector.shape_cast %4 : vector<1x16x128xf32> to vector<16x128xf32>
    %c0_8 = arith.constant 0 : index
    %c0_9 = arith.constant 0 : index
    %c0_10 = arith.constant 0 : index
    %6 = vector.load %arg4[%c0_8, %c0_9, %c0_10] : memref<1x8x8xf32, #tpu.memory_space<vmem>>, vector<1x8x8xf32>
    %7 = vector.shape_cast %6 : vector<1x8x8xf32> to vector<8x8xf32>
    %c0_11 = arith.constant 0 : index
    %c0_12 = arith.constant 0 : index
    %c0_13 = arith.constant 0 : index
    %8 = vector.load %arg5[%c0_11, %c0_12, %c0_13] : memref<1x8x8xf32, #tpu.memory_space<vmem>>, vector<1x8x8xf32>
    %9 = vector.shape_cast %8 : vector<1x8x8xf32> to vector<8x8xf32>
    %c0_14 = arith.constant 0 : index
    %c0_15 = arith.constant 0 : index
    %c0_16 = arith.constant 0 : index
    %c0_17 = arith.constant 0 : index
    %10 = vector.load %arg6[%c0_14, %c0_15, %c0_16, %c0_17] : memref<1x2x8x16xf32, #tpu.memory_space<vmem>>, vector<1x1x8x16xf32>
    %11 = vector.shape_cast %10 : vector<1x1x8x16xf32> to vector<8x16xf32>
    %c0_18 = arith.constant 0 : index
    %c1 = arith.constant 1 : index
    %c0_19 = arith.constant 0 : index
    %c0_20 = arith.constant 0 : index
    %12 = vector.load %arg6[%c0_18, %c1, %c0_19, %c0_20] : memref<1x2x8x16xf32, #tpu.memory_space<vmem>>, vector<1x1x8x16xf32>
    %13 = vector.shape_cast %12 : vector<1x1x8x16xf32> to vector<8x16xf32>
    %c0_21 = arith.constant 0 : index
    %c0_22 = arith.constant 0 : index
    %14 = vector.load %arg7[%c0_21, %c0_22] : memref<128x896xf32, #tpu.memory_space<vmem>>, vector<128x512xf32>
    %cst = arith.constant dense<0.000000e+00> : vector<8x512xf32>
    %15 = tpu.matmul %1, %14, %cst {dimension_numbers = #tpu.dot_dimension_numbers<[1], [0], [0], [1], [0, 0, 1, 1], [], []>} : vector<8x128xf32>, vector<128x512xf32>, vector<8x512xf32> -> vector<8x512xf32>
    %cst_23 = arith.constant 0.000000e+00 : f32
    %16 = vector.broadcast %cst_23 : f32 to vector<8x512xf32>
    %17 = arith.maximumf %15, %16 : vector<8x512xf32>
    %c0_24 = arith.constant 0 : index
    %c512 = arith.constant 512 : index
    %18 = vector.load %arg7[%c0_24, %c512] : memref<128x896xf32, #tpu.memory_space<vmem>>, vector<128x256xf32>
    %cst_25 = arith.constant dense<0.000000e+00> : vector<16x256xf32>
    %19 = tpu.matmul %5, %18, %cst_25 {dimension_numbers = #tpu.dot_dimension_numbers<[1], [0], [0], [1], [0, 0, 1, 1], [], []>} : vector<16x128xf32>, vector<128x256xf32>, vector<16x256xf32> -> vector<16x256xf32>
    %cst_26 = arith.constant 0.000000e+00 : f32
    %20 = vector.broadcast %cst_26 : f32 to vector<16x256xf32>
    %21 = arith.maximumf %19, %20 : vector<16x256xf32>
    %c0_27 = arith.constant 0 : index
    %c768 = arith.constant 768 : index
    %22 = vector.load %arg7[%c0_27, %c768] : memref<128x896xf32, #tpu.memory_space<vmem>>, vector<128x128xf32>
    %cst_28 = arith.constant dense<0.000000e+00> : vector<8x128xf32>
    %23 = tpu.matmul %3, %22, %cst_28 {dimension_numbers = #tpu.dot_dimension_numbers<[1], [0], [0], [1], [0, 0, 1, 1], [], []>} : vector<8x128xf32>, vector<128x128xf32>, vector<8x128xf32> -> vector<8x128xf32>
    %cst_29 = arith.constant 0.000000e+00 : f32
    %24 = vector.broadcast %cst_29 : f32 to vector<8x128xf32>
    %25 = arith.maximumf %23, %24 : vector<8x128xf32>
    %26 = vector.extract_strided_slice %17 {offsets = [0, 0], sizes = [8, 128], strides = [1, 1]} : vector<8x512xf32> to vector<8x128xf32>
    %27 = vector.extract_strided_slice %17 {offsets = [0, 128], sizes = [8, 128], strides = [1, 1]} : vector<8x512xf32> to vector<8x128xf32>
    %28 = vector.extract_strided_slice %17 {offsets = [0, 256], sizes = [8, 128], strides = [1, 1]} : vector<8x512xf32> to vector<8x128xf32>
    %29 = vector.extract_strided_slice %17 {offsets = [0, 384], sizes = [8, 128], strides = [1, 1]} : vector<8x512xf32> to vector<8x128xf32>
    %30 = vector.extract_strided_slice %21 {offsets = [0, 0], sizes = [16, 128], strides = [1, 1]} : vector<16x256xf32> to vector<16x128xf32>
    %31 = vector.extract_strided_slice %21 {offsets = [0, 128], sizes = [16, 128], strides = [1, 1]} : vector<16x256xf32> to vector<16x128xf32>
    %cst_30 = arith.constant dense<0.000000e+00> : vector<8xf32>
    %32 = vector.multi_reduction <add>, %7, %cst_30 [0] : vector<8x8xf32> to vector<8xf32>
    %33 = vector.shape_cast %32 : vector<8xf32> to vector<1x8xf32>
    %cst_31 = arith.constant 1.000000e-07 : f32
    %34 = vector.broadcast %cst_31 : f32 to vector<1x8xf32>
    %35 = arith.addf %33, %34 : vector<1x8xf32>
    %36 = tpu.reciprocal %35 : vector<1x8xf32> -> vector<1x8xf32>
    %37 = vector.broadcast %36 : vector<1x8xf32> to vector<8x8xf32>
    %38 = arith.mulf %7, %37 : vector<8x8xf32>
    %cst_32 = arith.constant dense<0.000000e+00> : vector<8x128xf32>
    %39 = tpu.matmul %38, %26, %cst_32 {dimension_numbers = #tpu.dot_dimension_numbers<[0], [0], [1], [1], [0, 1, 1, 1], [], []>} : vector<8x8xf32>, vector<8x128xf32>, vector<8x128xf32> -> vector<8x128xf32>
    %40 = arith.addf %3, %39 : vector<8x128xf32>
    %c0_33 = arith.constant 0 : index
    %c0_34 = arith.constant 0 : index
    %c0_35 = arith.constant 0 : index
    %41 = vector.load %arg9[%c0_33, %c0_34, %c0_35] : memref<1x8x128xf32, #tpu.memory_space<vmem>>, vector<1x8x128xf32>
    %42 = vector.shape_cast %41 : vector<1x8x128xf32> to vector<8x128xf32>
    %43 = vector.shape_cast %40 : vector<8x128xf32> to vector<1x8x128xf32>
    tpu.vector_store %arg9[%c0_33, %c0_34, %c0_35], %43 {strides = array<i32>} : memref<1x8x128xf32, #tpu.memory_space<vmem>>, vector<1x8x128xf32>,
    %cst_36 = arith.constant dense<0.000000e+00> : vector<8xf32>
    %44 = vector.multi_reduction <add>, %7, %cst_36 [1] : vector<8x8xf32> to vector<8xf32>
    %45 = vector.shape_cast %44 : vector<8xf32> to vector<8x1xf32>
    %cst_37 = arith.constant 1.000000e-07 : f32
    %46 = vector.broadcast %cst_37 : f32 to vector<8x1xf32>
    %47 = arith.addf %45, %46 : vector<8x1xf32>
    %48 = tpu.reciprocal %47 : vector<8x1xf32> -> vector<8x1xf32>
    %49 = vector.broadcast %48 : vector<8x1xf32> to vector<8x8xf32>
    %50 = arith.mulf %7, %49 : vector<8x8xf32>
    %cst_38 = arith.constant dense<0.000000e+00> : vector<8x128xf32>
    %51 = tpu.matmul %50, %25, %cst_38 {dimension_numbers = #tpu.dot_dimension_numbers<[1], [0], [0], [1], [0, 0, 1, 1], [], []>} : vector<8x8xf32>, vector<8x128xf32>, vector<8x128xf32> -> vector<8x128xf32>
    %cst_39 = arith.constant dense<0.000000e+00> : vector<8xf32>
    %52 = vector.multi_reduction <add>, %9, %cst_39 [1] : vector<8x8xf32> to vector<8xf32>
    %53 = vector.shape_cast %52 : vector<8xf32> to vector<8x1xf32>
    %cst_40 = arith.constant 1.000000e-07 : f32
    %54 = vector.broadcast %cst_40 : f32 to vector<8x1xf32>
    %55 = arith.addf %53, %54 : vector<8x1xf32>
    %56 = tpu.reciprocal %55 : vector<8x1xf32> -> vector<8x1xf32>
    %57 = vector.broadcast %56 : vector<8x1xf32> to vector<8x8xf32>
    %58 = arith.mulf %9, %57 : vector<8x8xf32>
    %cst_41 = arith.constant dense<0.000000e+00> : vector<8x128xf32>
    %59 = tpu.matmul %58, %27, %cst_41 {dimension_numbers = #tpu.dot_dimension_numbers<[1], [0], [0], [1], [0, 0, 1, 1], [], []>} : vector<8x8xf32>, vector<8x128xf32>, vector<8x128xf32> -> vector<8x128xf32>
    %cst_42 = arith.constant dense<0.000000e+00> : vector<8xf32>
    %60 = vector.multi_reduction <add>, %11, %cst_42 [1] : vector<8x16xf32> to vector<8xf32>
    %61 = vector.shape_cast %60 : vector<8xf32> to vector<8x1xf32>
    %cst_43 = arith.constant 1.000000e-07 : f32
    %62 = vector.broadcast %cst_43 : f32 to vector<8x1xf32>
    %63 = arith.addf %61, %62 : vector<8x1xf32>
    %64 = tpu.reciprocal %63 : vector<8x1xf32> -> vector<8x1xf32>
    %65 = vector.broadcast %64 : vector<8x1xf32> to vector<8x16xf32>
    %66 = arith.mulf %11, %65 : vector<8x16xf32>
    %cst_44 = arith.constant dense<0.000000e+00> : vector<8x128xf32>
    %67 = tpu.matmul %66, %30, %cst_44 {dimension_numbers = #tpu.dot_dimension_numbers<[1], [0], [0], [1], [0, 0, 1, 1], [], []>} : vector<8x16xf32>, vector<16x128xf32>, vector<8x128xf32> -> vector<8x128xf32>
    %cst_45 = arith.constant dense<0.000000e+00> : vector<8xf32>
    %68 = vector.multi_reduction <add>, %13, %cst_45 [1] : vector<8x16xf32> to vector<8xf32>
    %69 = vector.shape_cast %68 : vector<8xf32> to vector<8x1xf32>
    %cst_46 = arith.constant 1.000000e-07 : f32
    %70 = vector.broadcast %cst_46 : f32 to vector<8x1xf32>
    %71 = arith.addf %69, %70 : vector<8x1xf32>
    %72 = tpu.reciprocal %71 : vector<8x1xf32> -> vector<8x1xf32>
    %73 = vector.broadcast %72 : vector<8x1xf32> to vector<8x16xf32>
    %74 = arith.mulf %13, %73 : vector<8x16xf32>
    %cst_47 = arith.constant dense<0.000000e+00> : vector<8x128xf32>
    %75 = tpu.matmul %74, %31, %cst_47 {dimension_numbers = #tpu.dot_dimension_numbers<[1], [0], [0], [1], [0, 0, 1, 1], [], []>} : vector<8x16xf32>, vector<16x128xf32>, vector<8x128xf32> -> vector<8x128xf32>
    %76 = arith.addf %51, %59 : vector<8x128xf32>
    %77 = arith.addf %76, %67 : vector<8x128xf32>
    %78 = arith.addf %77, %75 : vector<8x128xf32>
    %cst_48 = arith.constant 2.500000e-01 : f32
    %79 = vector.broadcast %cst_48 : f32 to vector<8x128xf32>
    %80 = arith.mulf %78, %79 : vector<8x128xf32>
    %81 = arith.addf %1, %80 : vector<8x128xf32>
    %c0_49 = arith.constant 0 : index
    %c0_50 = arith.constant 0 : index
    %c0_51 = arith.constant 0 : index
    %82 = vector.load %arg8[%c0_49, %c0_50, %c0_51] : memref<1x8x128xf32, #tpu.memory_space<vmem>>, vector<1x8x128xf32>
    %83 = vector.shape_cast %82 : vector<1x8x128xf32> to vector<8x128xf32>
    %84 = vector.shape_cast %81 : vector<8x128xf32> to vector<1x8x128xf32>
    tpu.vector_store %arg8[%c0_49, %c0_50, %c0_51], %84 {strides = array<i32>} : memref<1x8x128xf32, #tpu.memory_space<vmem>>, vector<1x8x128xf32>,
    %cst_52 = arith.constant dense<0.000000e+00> : vector<16xf32>
    %85 = vector.multi_reduction <add>, %11, %cst_52 [0] : vector<8x16xf32> to vector<16xf32>
    %86 = vector.shape_cast %85 : vector<16xf32> to vector<1x16xf32>
    %cst_53 = arith.constant 1.000000e-07 : f32
    %87 = vector.broadcast %cst_53 : f32 to vector<1x16xf32>
    %88 = arith.addf %86, %87 : vector<1x16xf32>
    %89 = tpu.reciprocal %88 : vector<1x16xf32> -> vector<1x16xf32>
    %90 = vector.broadcast %89 : vector<1x16xf32> to vector<8x16xf32>
    %91 = arith.mulf %11, %90 : vector<8x16xf32>
    %cst_54 = arith.constant dense<0.000000e+00> : vector<16x128xf32>
    %92 = tpu.matmul %91, %28, %cst_54 {dimension_numbers = #tpu.dot_dimension_numbers<[0], [0], [1], [1], [0, 1, 1, 1], [], []>} : vector<8x16xf32>, vector<8x128xf32>, vector<16x128xf32> -> vector<16x128xf32>
    %cst_55 = arith.constant dense<0.000000e+00> : vector<16xf32>
    %93 = vector.multi_reduction <add>, %13, %cst_55 [0] : vector<8x16xf32> to vector<16xf32>
    %94 = vector.shape_cast %93 : vector<16xf32> to vector<1x16xf32>
    %cst_56 = arith.constant 1.000000e-07 : f32
    %95 = vector.broadcast %cst_56 : f32 to vector<1x16xf32>
    %96 = arith.addf %94, %95 : vector<1x16xf32>
    %97 = tpu.reciprocal %96 : vector<1x16xf32> -> vector<1x16xf32>
    %98 = vector.broadcast %97 : vector<1x16xf32> to vector<8x16xf32>
    %99 = arith.mulf %13, %98 : vector<8x16xf32>
    %cst_57 = arith.constant dense<0.000000e+00> : vector<16x128xf32>
    %100 = tpu.matmul %99, %29, %cst_57 {dimension_numbers = #tpu.dot_dimension_numbers<[0], [0], [1], [1], [0, 1, 1, 1], [], []>} : vector<8x16xf32>, vector<8x128xf32>, vector<16x128xf32> -> vector<16x128xf32>
    %101 = arith.addf %92, %100 : vector<16x128xf32>
    %cst_58 = arith.constant 5.000000e-01 : f32
    %102 = vector.broadcast %cst_58 : f32 to vector<16x128xf32>
    %103 = arith.mulf %101, %102 : vector<16x128xf32>
    %104 = arith.addf %5, %103 : vector<16x128xf32>
    %c0_59 = arith.constant 0 : index
    %c0_60 = arith.constant 0 : index
    %c0_61 = arith.constant 0 : index
    %105 = vector.load %arg10[%c0_59, %c0_60, %c0_61] : memref<1x16x128xf32, #tpu.memory_space<vmem>>, vector<1x16x128xf32>
    %106 = vector.shape_cast %105 : vector<1x16x128xf32> to vector<16x128xf32>
    %107 = vector.shape_cast %104 : vector<16x128xf32> to vector<1x16x128xf32>
    tpu.vector_store %arg10[%c0_59, %c0_60, %c0_61], %107 {strides = array<i32>} : memref<1x16x128xf32, #tpu.memory_space<vmem>>, vector<1x16x128xf32>,
    return
  }
  func.func @transform_0(%arg0: i32) -> (i32, i32, i32) {
    %c0_i32 = arith.constant 0 : i32
    %c0_i32_0 = arith.constant 0 : i32
    %c0_i32_1 = arith.constant 0 : i32
    return %arg0, %c0_i32, %c0_i32_0 : i32, i32, i32
  }
  func.func @transform_1(%arg0: i32) -> (i32, i32, i32) {
    %c0_i32 = arith.constant 0 : i32
    %c0_i32_0 = arith.constant 0 : i32
    %c0_i32_1 = arith.constant 0 : i32
    return %arg0, %c0_i32, %c0_i32_0 : i32, i32, i32
  }
  func.func @transform_2(%arg0: i32) -> (i32, i32, i32) {
    %c0_i32 = arith.constant 0 : i32
    %c0_i32_0 = arith.constant 0 : i32
    %c0_i32_1 = arith.constant 0 : i32
    return %arg0, %c0_i32, %c0_i32_0 : i32, i32, i32
  }
  func.func @transform_3(%arg0: i32) -> (i32, i32, i32) {
    %c0_i32 = arith.constant 0 : i32
    %c0_i32_0 = arith.constant 0 : i32
    %c0_i32_1 = arith.constant 0 : i32
    return %arg0, %c0_i32, %c0_i32_0 : i32, i32, i32
  }
  func.func @transform_4(%arg0: i32) -> (i32, i32, i32) {
    %c0_i32 = arith.constant 0 : i32
    %c0_i32_0 = arith.constant 0 : i32
    %c0_i32_1 = arith.constant 0 : i32
    return %arg0, %c0_i32, %c0_i32_0 : i32, i32, i32
  }
  func.func @transform_5(%arg0: i32) -> (i32, i32, i32, i32) {
    %c0_i32 = arith.constant 0 : i32
    %c0_i32_0 = arith.constant 0 : i32
    %c0_i32_1 = arith.constant 0 : i32
    %c0_i32_2 = arith.constant 0 : i32
    return %arg0, %c0_i32, %c0_i32_0, %c0_i32_1 : i32, i32, i32, i32
  }
  func.func @transform_6(%arg0: i32) -> (i32, i32) {
    %c0_i32 = arith.constant 0 : i32
    %c0_i32_0 = arith.constant 0 : i32
    %c0_i32_1 = arith.constant 0 : i32
    return %c0_i32, %c0_i32_0 : i32, i32
  }
  func.func @transform_7(%arg0: i32) -> (i32, i32, i32) {
    %c0_i32 = arith.constant 0 : i32
    %c0_i32_0 = arith.constant 0 : i32
    %c0_i32_1 = arith.constant 0 : i32
    return %arg0, %c0_i32, %c0_i32_0 : i32, i32, i32
  }
  func.func @transform_8(%arg0: i32) -> (i32, i32, i32) {
    %c0_i32 = arith.constant 0 : i32
    %c0_i32_0 = arith.constant 0 : i32
    %c0_i32_1 = arith.constant 0 : i32
    return %arg0, %c0_i32, %c0_i32_0 : i32, i32, i32
  }
  func.func @transform_9(%arg0: i32) -> (i32, i32, i32) {
    %c0_i32 = arith.constant 0 : i32
    %c0_i32_0 = arith.constant 0 : i32
    %c0_i32_1 = arith.constant 0 : i32
    return %arg0, %c0_i32, %c0_i32_0 : i32, i32, i32
  }
}

</mosaic_0001>

<llo_original>
// kernel: graph_conv_layer.1
$region0: #{graph_conv_layer.1}
  #allocation0 [shape = 'u32[]', space=smem, size = 0x4, offset = 0x4, fixed_abs, tag = 'smem constant byte address 0x4 - core index']
  #allocation1 [shape = 'u32[72,128]{1,0:T(1,128)}', space=vmem, size = 0x9000, scoped, tag = 'internal scratch']
  %s0 = inlined_call_operand.vmem [shape: f32[2,8,128], index: 0, kind: input, shape index: {}]
  %s1 = inlined_call_operand.vmem [shape: f32[2,8,128], index: 1, kind: input, shape index: {}]
  %s2 = inlined_call_operand.vmem [shape: f32[2,16,128], index: 2, kind: input, shape index: {}]
  %s3 = inlined_call_operand.vmem [shape: f32[2,8,8], index: 3, kind: input, shape index: {}]
  %s4 = inlined_call_operand.vmem [shape: f32[2,8,8], index: 4, kind: input, shape index: {}]
  %s5 = inlined_call_operand.vmem [shape: f32[2,2,8,16], index: 5, kind: input, shape index: {}]
  %s6 = inlined_call_operand.hbm [shape: f32[128,896], index: 6, kind: input, shape index: {}]
  %s7 = inlined_call_operand.hbm [shape: f32[2,8,128], index: 7, kind: output, shape index: {0}]
  %s8 = inlined_call_operand.hbm [shape: f32[2,8,128], index: 8, kind: output, shape index: {1}]
  %s9 = inlined_call_operand.hbm [shape: f32[2,16,128], index: 9, kind: output, shape index: {2}]
  %10 = xla_tuple %s7, %s8, %s9
  %s11 = sld [smem:[#allocation0]]
  $region81: #{graph_conv_layer.1} parent=0
    _
  %s13 = ssub.s32 1, %s11
  %s14 = scalar_select 0, %s13, %s11
  $region1: #{graph_conv_layer.1} parent=0
    #allocation2 [shape = 'u8[458752]{0}', space=vmem, size = 0x70000, scoped, tag = 'input window, operand 6, single buffered']
    #allocation3 [shape = 's32[2]{0}', space=sflag, size = 0x8, scoped, tag = 'scoped memory for graph_conv_layer.1']
    #allocation4 [shape = 's32[2]{0}', space=sflag, size = 0x8, scoped, tag = 'scoped memory for graph_conv_layer.1']
    #allocation5 [shape = 'u8[8192]{0}', space=vmem, size = 0x2000, scoped, tag = 'output window, operand 0']
    #allocation6 [shape = 'u8[8192]{0}', space=vmem, size = 0x2000, scoped, tag = 'output window, operand 1']
    #allocation7 [shape = 's32[2]{0}', space=sflag, size = 0x8, scoped, tag = 'scoped memory for graph_conv_layer.1']
    #allocation8 [shape = 'u8[16384]{0}', space=vmem, size = 0x4000, scoped, tag = 'output window, operand 2']
    %15 = vsyncpa [#allocation3], 0
    %16 = vsyncpa [#allocation4], 0
    %s17 = scalar_lea.sflag [#allocation4], 1
    %18 = vsyncpa %s17, 0
    %19 = vsyncpa [#allocation7], 0
    %s20 = scalar_lea.sflag [#allocation7], 1
    %21 = vsyncpa %s20, 0
    loop: start=0, step=1, limit=4
    $region2: #{graph_conv_layer.1} parent=1 // loop_pre_header
      _
    $region3: #{graph_conv_layer.1} parent=1 // loop_header
      %s23 = sphi 0, %s27
      %p24 = scmp.ge.s32.totalorder %s23, 4
      %s33 = sphi 0, %s35
      %s36 = sphi 0, %s33
      %s37 = sphi 0, %s36
      %s53 = sphi 0, %s37
      %s59 = sphi 0, %s61
      %s62 = sphi 0, %s59
      %s63 = sphi 0, %s62
      %s79 = sphi 0, %s63
      %s85 = sphi 0, %s87
      %s88 = sphi 0, %s85
      %s89 = sphi 0, %s88
      %s105 = sphi 0, %s89
      %s111 = sphi 0, %s113
      %s114 = sphi 0, %s111
      %s115 = sphi 0, %s114
      %s131 = sphi 0, %s115
      %s137 = sphi 0, %s139
      %s140 = sphi 0, %s137
      %s141 = sphi 0, %s140
      %s157 = sphi 0, %s141
      %s163 = sphi 0, %s165
      %s166 = sphi 0, %s163
      %s167 = sphi 0, %s166
      %s183 = sphi 0, %s167
      %s187 = sphi 0, %s187
      %s189 = sphi 0, %s187
      %s190 = sphi 0, %s189
      %s204 = sphi 0, %s190
      %s210 = sphi 0, %s212
      %s213 = sphi 0, %s210
      %s214 = sphi 0, %s213
      %s230 = sphi 0, %s214
      %s236 = sphi 0, %s238
      %s239 = sphi 0, %s236
      %s240 = sphi 0, %s239
      %s256 = sphi 0, %s240
      %s262 = sphi 0, %s264
      %s265 = sphi 0, %s262
      %s266 = sphi 0, %s265
      %s282 = sphi 0, %s266
    $region4: #{graph_conv_layer.1} parent=1 // loop_header_branch
      %26 = sbr.rel (%p24) target = $region8
    $region5: #{graph_conv_layer.1} parent=1 // loop_body
      %s28 = ssub.s32 %s23, 1
      %s29 = ssub.s32 %s23, 2
      %s30 = sadd.s32 %s23, 1
      %s31 = ssub.s32 %s23, %s30
      %p32 = scmp.eq.s32.totalorder %s31, 0
      %s34 = sadd.s32 %s33, 1
      %s35 = scalar_select %p32, %s33, %s34
      %p38 = pneg %p32
      %p39 = scmp.eq.s32.totalorder %s23, 1
      %p40 = por %p38, %p39
      %p41 = scmp.ne.s32.totalorder %s33, %s36
      %p42 = scmp.eq.s32.totalorder %s23, 0
      %p43 = por %p41, %p42
      %p44 = scmp.ne.s32.totalorder %s33, %s36
      %p45 = scmp.eq.s32.totalorder %s28, 1
      %p46 = por %p44, %p45
      %p47 = scmp.ne.s32.totalorder %s36, %s37
      %p48 = scmp.eq.s32.totalorder %s28, 0
      %p49 = por %p47, %p48
      %p50 = scmp.ne.s32.totalorder %s36, %s37
      %p51 = scmp.eq.s32.totalorder %s29, 1
      %p52 = por %p50, %p51
      %p54 = scmp.ne.s32.totalorder %s37, %s53
      %p55 = scmp.eq.s32.totalorder %s29, 0
      %p56 = por %p54, %p55
      %s57 = ssub.s32 %s23, %s30
      %p58 = scmp.eq.s32.totalorder %s57, 0
      %s60 = sadd.s32 %s59, 1
      %s61 = scalar_select %p58, %s59, %s60
      %p64 = pneg %p58
      %p65 = scmp.eq.s32.totalorder %s23, 1
      %p66 = por %p64, %p65
      %p67 = scmp.ne.s32.totalorder %s59, %s62
      %p68 = scmp.eq.s32.totalorder %s23, 0
      %p69 = por %p67, %p68
      %p70 = scmp.ne.s32.totalorder %s59, %s62
      %p71 = scmp.eq.s32.totalorder %s28, 1
      %p72 = por %p70, %p71
      %p73 = scmp.ne.s32.totalorder %s62, %s63
      %p74 = scmp.eq.s32.totalorder %s28, 0
      %p75 = por %p73, %p74
      %p76 = scmp.ne.s32.totalorder %s62, %s63
      %p77 = scmp.eq.s32.totalorder %s29, 1
      %p78 = por %p76, %p77
      %p80 = scmp.ne.s32.totalorder %s63, %s79
      %p81 = scmp.eq.s32.totalorder %s29, 0
      %p82 = por %p80, %p81
      %s83 = ssub.s32 %s23, %s30
      %p84 = scmp.eq.s32.totalorder %s83, 0
      %s86 = sadd.s32 %s85, 1
      %s87 = scalar_select %p84, %s85, %s86
      %p90 = pneg %p84
      %p91 = scmp.eq.s32.totalorder %s23, 1
      %p92 = por %p90, %p91
      %p93 = scmp.ne.s32.totalorder %s85, %s88
      %p94 = scmp.eq.s32.totalorder %s23, 0
      %p95 = por %p93, %p94
      %p96 = scmp.ne.s32.totalorder %s85, %s88
      %p97 = scmp.eq.s32.totalorder %s28, 1
      %p98 = por %p96, %p97
      %p99 = scmp.ne.s32.totalorder %s88, %s89
      %p100 = scmp.eq.s32.totalorder %s28, 0
      %p101 = por %p99, %p100
      %p102 = scmp.ne.s32.totalorder %s88, %s89
      %p103 = scmp.eq.s32.totalorder %s29, 1
      %p104 = por %p102, %p103
      %p106 = scmp.ne.s32.totalorder %s89, %s105
      %p107 = scmp.eq.s32.totalorder %s29, 0
      %p108 = por %p106, %p107
      %s109 = ssub.s32 %s23, %s30
      %p110 = scmp.eq.s32.totalorder %s109, 0
      %s112 = sadd.s32 %s111, 1
      %s113 = scalar_select %p110, %s111, %s112
      %p116 = pneg %p110
      %p117 = scmp.eq.s32.totalorder %s23, 1
      %p118 = por %p116, %p117
      %p119 = scmp.ne.s32.totalorder %s111, %s114
      %p120 = scmp.eq.s32.totalorder %s23, 0
      %p121 = por %p119, %p120
      %p122 = scmp.ne.s32.totalorder %s111, %s114
      %p123 = scmp.eq.s32.totalorder %s28, 1
      %p124 = por %p122, %p123
      %p125 = scmp.ne.s32.totalorder %s114, %s115
      %p126 = scmp.eq.s32.totalorder %s28, 0
      %p127 = por %p125, %p126
      %p128 = scmp.ne.s32.totalorder %s114, %s115
      %p129 = scmp.eq.s32.totalorder %s29, 1
      %p130 = por %p128, %p129
      %p132 = scmp.ne.s32.totalorder %s115, %s131
      %p133 = scmp.eq.s32.totalorder %s29, 0
      %p134 = por %p132, %p133
      %s135 = ssub.s32 %s23, %s30
      %p136 = scmp.eq.s32.totalorder %s135, 0
      %s138 = sadd.s32 %s137, 1
      %s139 = scalar_select %p136, %s137, %s138
      %p142 = pneg %p136
      %p143 = scmp.eq.s32.totalorder %s23, 1
      %p144 = por %p142, %p143
      %p145 = scmp.ne.s32.totalorder %s137, %s140
      %p146 = scmp.eq.s32.totalorder %s23, 0
      %p147 = por %p145, %p146
      %p148 = scmp.ne.s32.totalorder %s137, %s140
      %p149 = scmp.eq.s32.totalorder %s28, 1
      %p150 = por %p148, %p149
      %p151 = scmp.ne.s32.totalorder %s140, %s141
      %p152 = scmp.eq.s32.totalorder %s28, 0
      %p153 = por %p151, %p152
      %p154 = scmp.ne.s32.totalorder %s140, %s141
      %p155 = scmp.eq.s32.totalorder %s29, 1
      %p156 = por %p154, %p155
      %p158 = scmp.ne.s32.totalorder %s141, %s157
      %p159 = scmp.eq.s32.totalorder %s29, 0
      %p160 = por %p158, %p159
      %s161 = ssub.s32 %s23, %s30
      %p162 = scmp.eq.s32.totalorder %s161, 0
      %s164 = sadd.s32 %s163, 1
      %s165 = scalar_select %p162, %s163, %s164
      %p168 = pneg %p162
      %p169 = scmp.eq.s32.totalorder %s23, 1
      %p170 = por %p168, %p169
      %p171 = scmp.ne.s32.totalorder %s163, %s166
      %p172 = scmp.eq.s32.totalorder %s23, 0
      %p173 = por %p171, %p172
      %p174 = scmp.ne.s32.totalorder %s163, %s166
      %p175 = scmp.eq.s32.totalorder %s28, 1
      %p176 = por %p174, %p175
      %p177 = scmp.ne.s32.totalorder %s166, %s167
      %p178 = scmp.eq.s32.totalorder %s28, 0
      %p179 = por %p177, %p178
      %p180 = scmp.ne.s32.totalorder %s166, %s167
      %p181 = scmp.eq.s32.totalorder %s29, 1
      %p182 = por %p180, %p181
      %p184 = scmp.ne.s32.totalorder %s167, %s183
      %p185 = scmp.eq.s32.totalorder %s29, 0
      %p186 = por %p184, %p185
      %s188 = sadd.s32 %s187, 1
      %p191 = scmp.eq.s32.totalorder %s23, 1
      %p192 = scmp.ne.s32.totalorder %s187, %s189
      %p193 = scmp.eq.s32.totalorder %s23, 0
      %p194 = por %p192, %p193
      %p195 = scmp.ne.s32.totalorder %s187, %s189
      %p196 = scmp.eq.s32.totalorder %s28, 1
      %p197 = por %p195, %p196
      %p198 = scmp.ne.s32.totalorder %s189, %s190
      %p199 = scmp.eq.s32.totalorder %s28, 0
      %p200 = por %p198, %p199
      %p201 = scmp.ne.s32.totalorder %s189, %s190
      %p202 = scmp.eq.s32.totalorder %s29, 1
      %p203 = por %p201, %p202
      %p205 = scmp.ne.s32.totalorder %s190, %s204
      %p206 = scmp.eq.s32.totalorder %s29, 0
      %p207 = por %p205, %p206
      %s208 = ssub.s32 %s23, %s30
      %p209 = scmp.eq.s32.totalorder %s208, 0
      %s211 = sadd.s32 %s210, 1
      %s212 = scalar_select %p209, %s210, %s211
      %p215 = pneg %p209
      %p216 = scmp.eq.s32.totalorder %s23, 1
      %p217 = por %p215, %p216
      %p218 = scmp.ne.s32.totalorder %s210, %s213
      %p219 = scmp.eq.s32.totalorder %s23, 0
      %p220 = por %p218, %p219
      %p221 = scmp.ne.s32.totalorder %s210, %s213
      %p222 = scmp.eq.s32.totalorder %s28, 1
      %p223 = por %p221, %p222
      %p224 = scmp.ne.s32.totalorder %s213, %s214
      %p225 = scmp.eq.s32.totalorder %s28, 0
      %p226 = por %p224, %p225
      %p227 = scmp.ne.s32.totalorder %s213, %s214
      %p228 = scmp.eq.s32.totalorder %s29, 1
      %p229 = por %p227, %p228
      %p231 = scmp.ne.s32.totalorder %s214, %s230
      %p232 = scmp.eq.s32.totalorder %s29, 0
      %p233 = por %p231, %p232
      %s234 = ssub.s32 %s23, %s30
      %p235 = scmp.eq.s32.totalorder %s234, 0
      %s237 = sadd.s32 %s236, 1
      %s238 = scalar_select %p235, %s236, %s237
      %p241 = pneg %p235
      %p242 = scmp.eq.s32.totalorder %s23, 1
      %p243 = por %p241, %p242
      %p244 = scmp.ne.s32.totalorder %s236, %s239
      %p245 = scmp.eq.s32.totalorder %s23, 0
      %p246 = por %p244, %p245
      %p247 = scmp.ne.s32.totalorder %s236, %s239
      %p248 = scmp.eq.s32.totalorder %s28, 1
      %p249 = por %p247, %p248
      %p250 = scmp.ne.s32.totalorder %s239, %s240
      %p251 = scmp.eq.s32.totalorder %s28, 0
      %p252 = por %p250, %p251
      %p253 = scmp.ne.s32.totalorder %s239, %s240
      %p254 = scmp.eq.s32.totalorder %s29, 1
      %p255 = por %p253, %p254
      %p257 = scmp.ne.s32.totalorder %s240, %s256
      %p258 = scmp.eq.s32.totalorder %s29, 0
      %p259 = por %p257, %p258
      %s260 = ssub.s32 %s23, %s30
      %p261 = scmp.eq.s32.totalorder %s260, 0
      %s263 = sadd.s32 %s262, 1
      %s264 = scalar_select %p261, %s262, %s263
      %p267 = pneg %p261
      %p268 = scmp.eq.s32.totalorder %s23, 1
      %p269 = por %p267, %p268
      %p270 = scmp.ne.s32.totalorder %s262, %s265
      %p271 = scmp.eq.s32.totalorder %s23, 0
      %p272 = por %p270, %p271
      %p273 = scmp.ne.s32.totalorder %s262, %s265
      %p274 = scmp.eq.s32.totalorder %s28, 1
      %p275 = por %p273, %p274
      %p276 = scmp.ne.s32.totalorder %s265, %s266
      %p277 = scmp.eq.s32.totalorder %s28, 0
      %p278 = por %p276, %p277
      %p279 = scmp.ne.s32.totalorder %s265, %s266
      %p280 = scmp.eq.s32.totalorder %s29, 1
      %p281 = por %p279, %p280
      %p283 = scmp.ne.s32.totalorder %s266, %s282
      %p284 = scmp.eq.s32.totalorder %s29, 0
      %p285 = por %p283, %p284
      %p286 = scmp.le.s32.totalorder 1, %s23
      %p287 = scmp.lt.s32.totalorder %s23, 3
      %p288 = pnand %p286, %p287
      %p289 = pneg %p288
      // Predicated region
      $region9: #{graph_conv_layer.1} parent=5 // pred_check
        _
      $region10: #{graph_conv_layer.1} parent=5 // pred_check_branch
        %291 = sbr.rel (%p288) target = $region12
      $region11: #{graph_conv_layer.1} parent=5 // pred_region
        %s292 = ssub.s32 %s23, 1
        // Predicated region
        $region13: #{graph_conv_layer.1} parent=11 // pred_check
          %p293 = pneg %p200
        $region14: #{graph_conv_layer.1} parent=11 // pred_check_branch
          %295 = sbr.rel (%p293) target = $region16
        $region15: #{graph_conv_layer.1} parent=11 // pred_region
          %297 = vsyncadd [#allocation3], 0
          %s298 = sshll.u32 %s6, 4
          %s299 = int_to_ptr.hbm [resolvable:$true] %s298
          %s300 = sshll.u32 [#allocation2], 4
          %s301 = int_to_ptr.vmem [resolvable:$true] %s300
          %306 = dma.hbm_to_vmem [thread:$0]  %s299, 14336, %s301, [#allocation3], 896, 896, 56
        $region16: #{graph_conv_layer.1} parent=11 // pred_fallthru
          _
      $region12: #{graph_conv_layer.1} parent=5 // pred_fallthru
        _
      %p307 = scmp.lt.s32.totalorder %s23, 2
      // Predicated region
      $region17: #{graph_conv_layer.1} parent=5 // pred_check
        %p308 = pneg %p307
      $region18: #{graph_conv_layer.1} parent=5 // pred_check_branch
        %310 = sbr.rel (%p308) target = $region20
      $region19: #{graph_conv_layer.1} parent=5 // pred_region
        // Predicated region
        $region21: #{graph_conv_layer.1} parent=19 // pred_check
          %p311 = pneg %p43
        $region22: #{graph_conv_layer.1} parent=19 // pred_check_branch
          %313 = sbr.rel (%p311) target = $region24
        $region23: #{graph_conv_layer.1} parent=19 // pred_region
          %p314 = scmp.lt.s32.totalorder %s23, 1
          %s315 = scalar_select %p314, %s23, 1
          %s316 = smul.addr %s315, 8
          %s317 = scalar_lea.vmem %s0, %s316
        $region24: #{graph_conv_layer.1} parent=19 // pred_fallthru
          _
        // Predicated region
        $region25: #{graph_conv_layer.1} parent=19 // pred_check
          %p318 = pneg %p69
        $region26: #{graph_conv_layer.1} parent=19 // pred_check_branch
          %320 = sbr.rel (%p318) target = $region28
        $region27: #{graph_conv_layer.1} parent=19 // pred_region
          %p321 = scmp.lt.s32.totalorder %s23, 1
          %s322 = scalar_select %p321, %s23, 1
          %s323 = smul.addr %s322, 8
          %s324 = scalar_lea.vmem %s1, %s323
        $region28: #{graph_conv_layer.1} parent=19 // pred_fallthru
          _
        // Predicated region
        $region29: #{graph_conv_layer.1} parent=19 // pred_check
          %p325 = pneg %p95
        $region30: #{graph_conv_layer.1} parent=19 // pred_check_branch
          %327 = sbr.rel (%p325) target = $region32
        $region31: #{graph_conv_layer.1} parent=19 // pred_region
          %p328 = scmp.lt.s32.totalorder %s23, 1
          %s329 = scalar_select %p328, %s23, 1
          %s330 = smul.addr %s329, 2
          %s331 = smul.addr %s330, 8
          %s332 = scalar_lea.vmem %s2, %s331
        $region32: #{graph_conv_layer.1} parent=19 // pred_fallthru
          _
        // Predicated region
        $region33: #{graph_conv_layer.1} parent=19 // pred_check
          %p333 = pneg %p121
        $region34: #{graph_conv_layer.1} parent=19 // pred_check_branch
          %335 = sbr.rel (%p333) target = $region36
        $region35: #{graph_conv_layer.1} parent=19 // pred_region
          %p336 = scmp.lt.s32.totalorder %s23, 1
          %s337 = scalar_select %p336, %s23, 1
          %s338 = smul.addr %s337, 8
          %s339 = scalar_lea.vmem %s3, %s338
        $region36: #{graph_conv_layer.1} parent=19 // pred_fallthru
          _
        // Predicated region
        $region37: #{graph_conv_layer.1} parent=19 // pred_check
          %p340 = pneg %p147
        $region38: #{graph_conv_layer.1} parent=19 // pred_check_branch
          %342 = sbr.rel (%p340) target = $region40
        $region39: #{graph_conv_layer.1} parent=19 // pred_region
          %p343 = scmp.lt.s32.totalorder %s23, 1
          %s344 = scalar_select %p343, %s23, 1
          %s345 = smul.addr %s344, 8
          %s346 = scalar_lea.vmem %s4, %s345
        $region40: #{graph_conv_layer.1} parent=19 // pred_fallthru
          _
        // Predicated region
        $region41: #{graph_conv_layer.1} parent=19 // pred_check
          %p347 = pneg %p173
        $region42: #{graph_conv_layer.1} parent=19 // pred_check_branch
          %349 = sbr.rel (%p347) target = $region44
        $region43: #{graph_conv_layer.1} parent=19 // pred_region
          %p350 = scmp.lt.s32.totalorder %s23, 1
          %s351 = scalar_select %p350, %s23, 1
          %s352 = smul.addr %s351, 2
          %s353 = smul.addr %s352, 8
          %s354 = scalar_lea.vmem %s5, %s353
        $region44: #{graph_conv_layer.1} parent=19 // pred_fallthru
          _
      $region20: #{graph_conv_layer.1} parent=5 // pred_fallthru
        _
      %p355 = scmp.le.s32.totalorder 1, %s23
      %p356 = scmp.lt.s32.totalorder %s23, 3
      %p357 = pnand %p355, %p356
      %p358 = pneg %p357
      // Predicated region
      $region45: #{graph_conv_layer.1} parent=5 // pred_check
        _
      $region46: #{graph_conv_layer.1} parent=5 // pred_check_branch
        %360 = sbr.rel (%p357) target = $region48
      $region47: #{graph_conv_layer.1} parent=5 // pred_region
        %s361 = ssub.s32 %s23, 1
        // Predicated region
        $region49: #{graph_conv_layer.1} parent=47 // pred_check
          %p362 = pneg %p200
        $region50: #{graph_conv_layer.1} parent=47 // pred_check_branch
          %364 = sbr.rel (%p362) target = $region52
        $region51: #{graph_conv_layer.1} parent=47 // pred_region
          %366 = dma.done [#allocation3], 14336
        $region52: #{graph_conv_layer.1} parent=47 // pred_fallthru
          _
        %p367 = scmp.lt.s32.totalorder %s28, 1
        %s368 = scalar_select %p367, %s28, 1
        %s369 = smul.addr %s368, 8
        %s370 = scalar_lea.vmem %s0, %s369
        %p371 = pneg %p49
        %p372 = pneg %p46
        %p373 = scmp.lt.s32.totalorder %s28, 1
        %s374 = scalar_select %p373, %s28, 1
        %s375 = smul.addr %s374, 8
        %s376 = scalar_lea.vmem %s1, %s375
        %p377 = pneg %p75
        %p378 = pneg %p72
        %p379 = scmp.lt.s32.totalorder %s28, 1
        %s380 = scalar_select %p379, %s28, 1
        %s381 = smul.addr %s380, 2
        %s382 = smul.addr %s381, 8
        %s383 = scalar_lea.vmem %s2, %s382
        %p384 = pneg %p101
        %p385 = pneg %p98
        %p386 = scmp.lt.s32.totalorder %s28, 1
        %s387 = scalar_select %p386, %s28, 1
        %s388 = smul.addr %s387, 8
        %s389 = scalar_lea.vmem %s3, %s388
        %p390 = pneg %p127
        %p391 = pneg %p124
        %p392 = scmp.lt.s32.totalorder %s28, 1
        %s393 = scalar_select %p392, %s28, 1
        %s394 = smul.addr %s393, 8
        %s395 = scalar_lea.vmem %s4, %s394
        %p396 = pneg %p153
        %p397 = pneg %p150
        %p398 = scmp.lt.s32.totalorder %s28, 1
        %s399 = scalar_select %p398, %s28, 1
        %s400 = smul.addr %s399, 2
        %s401 = smul.addr %s400, 8
        %s402 = scalar_lea.vmem %s5, %s401
        %p403 = pneg %p179
        %p404 = pneg %p176
        %p405 = pneg %p200
        %p406 = pneg %p197
        %p407 = pneg %p226
        %p408 = pneg %p223
        %s409 = sand.u32 %s213, 1
        %s410 = scalar_lea.sflag [#allocation4], %s409
        %s411 = sand.u32 %s213, 1
        %s412 = smul.addr %s411, 8
        %s413 = scalar_lea.vmem [#allocation5], %s412
        %p414 = pneg %p252
        %p415 = pneg %p249
        %s416 = sand.u32 %s28, 1
        %s417 = scalar_lea.sflag [#allocation7], %s416
        %s418 = sand.u32 %s239, 1
        %s419 = smul.addr %s418, 8
        %s420 = scalar_lea.vmem [#allocation6], %s419
        %p421 = pneg %p278
        %p422 = pneg %p275
        %s423 = sand.u32 %s28, 1
        %s424 = scalar_lea.sflag [#allocation7], %s423
        %s425 = sand.u32 %s265, 1
        %s426 = smul.addr %s425, 16
        %s427 = scalar_lea.vmem [#allocation8], %s426
        %p428 = scmp.lt.s32.totalorder %s28, 1
        %s429 = scalar_select %p428, %s28, 1
        %s430 = smul.addr %s429, 8
        %s431 = scalar_lea.vmem %s0, %s430
        %p432 = scmp.lt.s32.totalorder %s28, 1
        %s433 = scalar_select %p432, %s28, 1
        %s434 = smul.addr %s433, 8
        %s435 = scalar_lea.vmem %s1, %s434
        %p436 = scmp.lt.s32.totalorder %s28, 1
        %s437 = scalar_select %p436, %s28, 1
        %s438 = smul.addr %s437, 2
        %s439 = smul.addr %s438, 8
        %s440 = scalar_lea.vmem %s2, %s439
        %p441 = scmp.lt.s32.totalorder %s28, 1
        %s442 = scalar_select %p441, %s28, 1
        %s443 = smul.addr %s442, 8
        %s444 = scalar_lea.vmem %s3, %s443
        %p445 = scmp.lt.s32.totalorder %s28, 1
        %s446 = scalar_select %p445, %s28, 1
        %s447 = smul.addr %s446, 8
        %s448 = scalar_lea.vmem %s4, %s447
        %p449 = scmp.lt.s32.totalorder %s28, 1
        %s450 = scalar_select %p449, %s28, 1
        %s451 = smul.addr %s450, 2
        %s452 = smul.addr %s451, 8
        %s453 = scalar_lea.vmem %s5, %s452
        %v454 = vld [vmem:[%s431] sm:$0xff]
        %v455 = vld [vmem:[%s435] sm:$0xff]
        %v456 = vld [vmem:[%s440] sm:$0xff]
        %v457 = vld [vmem:[%s440 + $0x8] sm:$0xff]
        %v458 = vld [vmem:[%s444] sm:$0xff]
        %v459 = vld [vmem:[%s448] sm:$0xff]
        %v460 = vld [vmem:[%s453] sm:$0xff]
        %s461 = scalar_lea.vmem %s453, 8
        %v462 = vld [vmem:[%s461] sm:$0xff]
        %v463 = vld [vmem:[#allocation2] sm:$0xff]
        %v464 = vld [vmem:[#allocation2 + $0x8] sm:$0xff]
        %v465 = vld [vmem:[#allocation2 + $0x10] sm:$0xff]
        %v466 = vld [vmem:[#allocation2 + $0x18] sm:$0xff]
        %v467 = vld [vmem:[#allocation2 + $0x38] sm:$0xff]
        %v468 = vld [vmem:[#allocation2 + $0x40] sm:$0xff]
        %v469 = vld [vmem:[#allocation2 + $0x48] sm:$0xff]
        %v470 = vld [vmem:[#allocation2 + $0x50] sm:$0xff]
        %v471 = vld [vmem:[#allocation2 + $0x70] sm:$0xff]
        %v472 = vld [vmem:[#allocation2 + $0x78] sm:$0xff]
        %v473 = vld [vmem:[#allocation2 + $0x80] sm:$0xff]
        %v474 = vld [vmem:[#allocation2 + $0x88] sm:$0xff]
        %v475 = vld [vmem:[#allocation2 + $0xa8] sm:$0xff]
        %v476 = vld [vmem:[#allocation2 + $0xb0] sm:$0xff]
        %v477 = vld [vmem:[#allocation2 + $0xb8] sm:$0xff]
        %v478 = vld [vmem:[#allocation2 + $0xc0] sm:$0xff]
        %v479 = vld [vmem:[#allocation2 + $0xe0] sm:$0xff]
        %v480 = vld [vmem:[#allocation2 + $0xe8] sm:$0xff]
        %v481 = vld [vmem:[#allocation2 + $0xf0] sm:$0xff]
        %v482 = vld [vmem:[#allocation2 + $0xf8] sm:$0xff]
        %v483 = vld [vmem:[#allocation2 + $0x118] sm:$0xff]
        %v484 = vld [vmem:[#allocation2 + $0x120] sm:$0xff]
        %v485 = vld [vmem:[#allocation2 + $0x128] sm:$0xff]
        %v486 = vld [vmem:[#allocation2 + $0x130] sm:$0xff]
        %v487 = vld [vmem:[#allocation2 + $0x150] sm:$0xff]
        %v488 = vld [vmem:[#allocation2 + $0x158] sm:$0xff]
        %v489 = vld [vmem:[#allocation2 + $0x160] sm:$0xff]
        %v490 = vld [vmem:[#allocation2 + $0x168] sm:$0xff]
        %v491 = vld [vmem:[#allocation2 + $0x188] sm:$0xff]
        %v492 = vld [vmem:[#allocation2 + $0x190] sm:$0xff]
        %v493 = vld [vmem:[#allocation2 + $0x198] sm:$0xff]
        %v494 = vld [vmem:[#allocation2 + $0x1a0] sm:$0xff]
        %v495 = vld [vmem:[#allocation2 + $0x1c0] sm:$0xff]
        %v496 = vld [vmem:[#allocation2 + $0x1c8] sm:$0xff]
        %v497 = vld [vmem:[#allocation2 + $0x1d0] sm:$0xff]
        %v498 = vld [vmem:[#allocation2 + $0x1d8] sm:$0xff]
        %v499 = vld [vmem:[#allocation2 + $0x1f8] sm:$0xff]
        %v500 = vld [vmem:[#allocation2 + $0x200] sm:$0xff]
        %v501 = vld [vmem:[#allocation2 + $0x208] sm:$0xff]
        %v502 = vld [vmem:[#allocation2 + $0x210] sm:$0xff]
        %v503 = vld [vmem:[#allocation2 + $0x230] sm:$0xff]
        %v504 = vld [vmem:[#allocation2 + $0x238] sm:$0xff]
        %v505 = vld [vmem:[#allocation2 + $0x240] sm:$0xff]
        %v506 = vld [vmem:[#allocation2 + $0x248] sm:$0xff]
        %v507 = vld [vmem:[#allocation2 + $0x268] sm:$0xff]
        %v508 = vld [vmem:[#allocation2 + $0x270] sm:$0xff]
        %v509 = vld [vmem:[#allocation2 + $0x278] sm:$0xff]
        %v510 = vld [vmem:[#allocation2 + $0x280] sm:$0xff]
        %v511 = vld [vmem:[#allocation2 + $0x2a0] sm:$0xff]
        %v512 = vld [vmem:[#allocation2 + $0x2a8] sm:$0xff]
        %v513 = vld [vmem:[#allocation2 + $0x2b0] sm:$0xff]
        %v514 = vld [vmem:[#allocation2 + $0x2b8] sm:$0xff]
        %v515 = vld [vmem:[#allocation2 + $0x2d8] sm:$0xff]
        %v516 = vld [vmem:[#allocation2 + $0x2e0] sm:$0xff]
        %v517 = vld [vmem:[#allocation2 + $0x2e8] sm:$0xff]
        %v518 = vld [vmem:[#allocation2 + $0x2f0] sm:$0xff]
        %v519 = vld [vmem:[#allocation2 + $0x310] sm:$0xff]
        %v520 = vld [vmem:[#allocation2 + $0x318] sm:$0xff]
        %v521 = vld [vmem:[#allocation2 + $0x320] sm:$0xff]
        %v522 = vld [vmem:[#allocation2 + $0x328] sm:$0xff]
        %v523 = vld [vmem:[#allocation2 + $0x348] sm:$0xff]
        %v524 = vld [vmem:[#allocation2 + $0x350] sm:$0xff]
        %v525 = vld [vmem:[#allocation2 + $0x358] sm:$0xff]
        %v526 = vld [vmem:[#allocation2 + $0x360] sm:$0xff]
        %527 = vmatpush.msra.mxu0 %v523
        %528 = vmatpush.msra.mxu0 %v519
        %529 = vmatpush.msra.mxu0 %v515
        %530 = vmatpush.msra.mxu0 %v511
        %531 = vmatpush.msra.mxu0 %v507
        %532 = vmatpush.msra.mxu0 %v503
        %533 = vmatpush.msra.mxu0 %v499
        %534 = vmatpush.msra.mxu0 %v495
        %535 = vmatpush.msra.mxu0 %v491
        %536 = vmatpush.msra.mxu0 %v487
        %537 = vmatpush.msra.mxu0 %v483
        %538 = vmatpush.msra.mxu0 %v479
        %539 = vmatpush.msra.mxu0 %v475
        %540 = vmatpush.msra.mxu0 %v471
        %541 = vmatpush.msra.mxu0 %v467
        %542 = vmatpush.msra.mxu0 %v463
        %543 = vmatmul.f32.gmra.mxu0 %v454
        %v544 = vpop.f32.mrf.mxu0
        %v545 = vadd.f32 0.0, %v544
        %546 = vdwg.mxu0
        %547 = vmatpush.msra.mxu0 %v524
        %548 = vmatpush.msra.mxu0 %v520
        %549 = vmatpush.msra.mxu0 %v516
        %550 = vmatpush.msra.mxu0 %v512
        %551 = vmatpush.msra.mxu0 %v508
        %552 = vmatpush.msra.mxu0 %v504
        %553 = vmatpush.msra.mxu0 %v500
        %554 = vmatpush.msra.mxu0 %v496
        %555 = vmatpush.msra.mxu0 %v492
        %556 = vmatpush.msra.mxu0 %v488
        %557 = vmatpush.msra.mxu0 %v484
        %558 = vmatpush.msra.mxu0 %v480
        %559 = vmatpush.msra.mxu0 %v476
        %560 = vmatpush.msra.mxu0 %v472
        %561 = vmatpush.msra.mxu0 %v468
        %562 = vmatpush.msra.mxu0 %v464
        %563 = vmatmul.f32.gmra.mxu0 %v454
        %v564 = vpop.f32.mrf.mxu0
        %v565 = vadd.f32 0.0, %v564
        %566 = vdwg.mxu0
        %567 = vmatpush.msra.mxu0 %v525
        %568 = vmatpush.msra.mxu0 %v521
        %569 = vmatpush.msra.mxu0 %v517
        %570 = vmatpush.msra.mxu0 %v513
        %571 = vmatpush.msra.mxu0 %v509
        %572 = vmatpush.msra.mxu0 %v505
        %573 = vmatpush.msra.mxu0 %v501
        %574 = vmatpush.msra.mxu0 %v497
        %575 = vmatpush.msra.mxu0 %v493
        %576 = vmatpush.msra.mxu0 %v489
        %577 = vmatpush.msra.mxu0 %v485
        %578 = vmatpush.msra.mxu0 %v481
        %579 = vmatpush.msra.mxu0 %v477
        %580 = vmatpush.msra.mxu0 %v473
        %581 = vmatpush.msra.mxu0 %v469
        %582 = vmatpush.msra.mxu0 %v465
        %583 = vmatmul.f32.gmra.mxu0 %v454
        %v584 = vpop.f32.mrf.mxu0
        %v585 = vadd.f32 0.0, %v584
        %586 = vdwg.mxu0
        %587 = vmatpush.msra.mxu0 %v526
        %588 = vmatpush.msra.mxu0 %v522
        %589 = vmatpush.msra.mxu0 %v518
        %590 = vmatpush.msra.mxu0 %v514
        %591 = vmatpush.msra.mxu0 %v510
        %592 = vmatpush.msra.mxu0 %v506
        %593 = vmatpush.msra.mxu0 %v502
        %594 = vmatpush.msra.mxu0 %v498
        %595 = vmatpush.msra.mxu0 %v494
        %596 = vmatpush.msra.mxu0 %v490
        %597 = vmatpush.msra.mxu0 %v486
        %598 = vmatpush.msra.mxu0 %v482
        %599 = vmatpush.msra.mxu0 %v478
        %600 = vmatpush.msra.mxu0 %v474
        %601 = vmatpush.msra.mxu0 %v470
        %602 = vmatpush.msra.mxu0 %v466
        %603 = vmatmul.f32.gmra.mxu0 %v454
        %v604 = vpop.f32.mrf.mxu0
        %v605 = vadd.f32 0.0, %v604
        %606 = vdwg.mxu0
        %v607 = vmax.f32 %v545, 0.0
        %v608 = vmax.f32 %v565, 0.0
        %v609 = vmax.f32 %v585, 0.0
        %v610 = vmax.f32 %v605, 0.0
        %v611 = vld [vmem:[#allocation2 + $0x20] sm:$0xff]
        %v612 = vld [vmem:[#allocation2 + $0x28] sm:$0xff]
        %v613 = vld [vmem:[#allocation2 + $0x58] sm:$0xff]
        %v614 = vld [vmem:[#allocation2 + $0x60] sm:$0xff]
        %v615 = vld [vmem:[#allocation2 + $0x90] sm:$0xff]
        %v616 = vld [vmem:[#allocation2 + $0x98] sm:$0xff]
        %v617 = vld [vmem:[#allocation2 + $0xc8] sm:$0xff]
        %v618 = vld [vmem:[#allocation2 + $0xd0] sm:$0xff]
        %v619 = vld [vmem:[#allocation2 + $0x100] sm:$0xff]
        %v620 = vld [vmem:[#allocation2 + $0x108] sm:$0xff]
        %v621 = vld [vmem:[#allocation2 + $0x138] sm:$0xff]
        %v622 = vld [vmem:[#allocation2 + $0x140] sm:$0xff]
        %v623 = vld [vmem:[#allocation2 + $0x170] sm:$0xff]
        %v624 = vld [vmem:[#allocation2 + $0x178] sm:$0xff]
        %v625 = vld [vmem:[#allocation2 + $0x1a8] sm:$0xff]
        %v626 = vld [vmem:[#allocation2 + $0x1b0] sm:$0xff]
        %v627 = vld [vmem:[#allocation2 + $0x1e0] sm:$0xff]
        %v628 = vld [vmem:[#allocation2 + $0x1e8] sm:$0xff]
        %v629 = vld [vmem:[#allocation2 + $0x218] sm:$0xff]
        %v630 = vld [vmem:[#allocation2 + $0x220] sm:$0xff]
        %v631 = vld [vmem:[#allocation2 + $0x250] sm:$0xff]
        %v632 = vld [vmem:[#allocation2 + $0x258] sm:$0xff]
        %v633 = vld [vmem:[#allocation2 + $0x288] sm:$0xff]
        %v634 = vld [vmem:[#allocation2 + $0x290] sm:$0xff]
        %v635 = vld [vmem:[#allocation2 + $0x2c0] sm:$0xff]
        %v636 = vld [vmem:[#allocation2 + $0x2c8] sm:$0xff]
        %v637 = vld [vmem:[#allocation2 + $0x2f8] sm:$0xff]
        %v638 = vld [vmem:[#allocation2 + $0x300] sm:$0xff]
        %v639 = vld [vmem:[#allocation2 + $0x330] sm:$0xff]
        %v640 = vld [vmem:[#allocation2 + $0x338] sm:$0xff]
        %v641 = vld [vmem:[#allocation2 + $0x368] sm:$0xff]
        %v642 = vld [vmem:[#allocation2 + $0x370] sm:$0xff]
        %643 = vmatpush.msra.mxu0 %v641
        %644 = vmatpush.msra.mxu0 %v639
        %645 = vmatpush.msra.mxu0 %v637
        %646 = vmatpush.msra.mxu0 %v635
        %647 = vmatpush.msra.mxu0 %v633
        %648 = vmatpush.msra.mxu0 %v631
        %649 = vmatpush.msra.mxu0 %v629
        %650 = vmatpush.msra.mxu0 %v627
        %651 = vmatpush.msra.mxu0 %v625
        %652 = vmatpush.msra.mxu0 %v623
        %653 = vmatpush.msra.mxu0 %v621
        %654 = vmatpush.msra.mxu0 %v619
        %655 = vmatpush.msra.mxu0 %v617
        %656 = vmatpush.msra.mxu0 %v615
        %657 = vmatpush.msra.mxu0 %v613
        %658 = vmatpush.msra.mxu0 %v611
        %659 = vmatmul.f32.gmra.mxu0 %v456
        %v660 = vpop.f32.mrf.mxu0
        %v661 = vadd.f32 0.0, %v660
        %662 = vmatmul.f32.gmra.mxu0 %v457
        %v663 = vpop.f32.mrf.mxu0
        %v664 = vadd.f32 0.0, %v663
        %665 = vdwg.mxu0
        %666 = vmatpush.msra.mxu0 %v642
        %667 = vmatpush.msra.mxu0 %v640
        %668 = vmatpush.msra.mxu0 %v638
        %669 = vmatpush.msra.mxu0 %v636
        %670 = vmatpush.msra.mxu0 %v634
        %671 = vmatpush.msra.mxu0 %v632
        %672 = vmatpush.msra.mxu0 %v630
        %673 = vmatpush.msra.mxu0 %v628
        %674 = vmatpush.msra.mxu0 %v626
        %675 = vmatpush.msra.mxu0 %v624
        %676 = vmatpush.msra.mxu0 %v622
        %677 = vmatpush.msra.mxu0 %v620
        %678 = vmatpush.msra.mxu0 %v618
        %679 = vmatpush.msra.mxu0 %v616
        %680 = vmatpush.msra.mxu0 %v614
        %681 = vmatpush.msra.mxu0 %v612
        %682 = vmatmul.f32.gmra.mxu0 %v456
        %v683 = vpop.f32.mrf.mxu0
        %v684 = vadd.f32 0.0, %v683
        %685 = vmatmul.f32.gmra.mxu0 %v457
        %v686 = vpop.f32.mrf.mxu0
        %v687 = vadd.f32 0.0, %v686
        %688 = vdwg.mxu0
        %v689 = vmax.f32 %v661, 0.0
        %v690 = vmax.f32 %v684, 0.0
        %v691 = vmax.f32 %v664, 0.0
        %v692 = vmax.f32 %v687, 0.0
        %v693 = vld [vmem:[#allocation2 + $0x30] sm:$0xff]
        %v694 = vld [vmem:[#allocation2 + $0x68] sm:$0xff]
        %v695 = vld [vmem:[#allocation2 + $0xa0] sm:$0xff]
        %v696 = vld [vmem:[#allocation2 + $0xd8] sm:$0xff]
        %v697 = vld [vmem:[#allocation2 + $0x110] sm:$0xff]
        %v698 = vld [vmem:[#allocation2 + $0x148] sm:$0xff]
        %v699 = vld [vmem:[#allocation2 + $0x180] sm:$0xff]
        %v700 = vld [vmem:[#allocation2 + $0x1b8] sm:$0xff]
        %v701 = vld [vmem:[#allocation2 + $0x1f0] sm:$0xff]
        %v702 = vld [vmem:[#allocation2 + $0x228] sm:$0xff]
        %v703 = vld [vmem:[#allocation2 + $0x260] sm:$0xff]
        %v704 = vld [vmem:[#allocation2 + $0x298] sm:$0xff]
        %v705 = vld [vmem:[#allocation2 + $0x2d0] sm:$0xff]
        %v706 = vld [vmem:[#allocation2 + $0x308] sm:$0xff]
        %v707 = vld [vmem:[#allocation2 + $0x340] sm:$0xff]
        %v708 = vld [vmem:[#allocation2 + $0x378] sm:$0xff]
        %709 = vmatpush.msra.mxu0 %v708
        %710 = vmatpush.msra.mxu0 %v707
        %711 = vmatpush.msra.mxu0 %v706
        %712 = vmatpush.msra.mxu0 %v705
        %713 = vmatpush.msra.mxu0 %v704
        %714 = vmatpush.msra.mxu0 %v703
        %715 = vmatpush.msra.mxu0 %v702
        %716 = vmatpush.msra.mxu0 %v701
        %717 = vmatpush.msra.mxu0 %v700
        %718 = vmatpush.msra.mxu0 %v699
        %719 = vmatpush.msra.mxu0 %v698
        %720 = vmatpush.msra.mxu0 %v697
        %721 = vmatpush.msra.mxu0 %v696
        %722 = vmatpush.msra.mxu0 %v695
        %723 = vmatpush.msra.mxu0 %v694
        %724 = vmatpush.msra.mxu0 %v693
        %725 = vmatmul.f32.gmra.mxu0 %v455
        %v726 = vpop.f32.mrf.mxu0
        %v727 = vadd.f32 0.0, %v726
        %728 = vdwg.mxu0
        %v729 = vmax.f32 %v727, 0.0
        %vm730 = vcmask 64512
        %v731 = vsel %vm730, %v458, 0.0
        %v732 = vrot.slane %v731, 4
        %v733 = vadd.f32 %v731, %v732
        %v734 = vrot.slane %v733, 2
        %v735 = vadd.f32 %v733, %v734
        %v736 = vrot.slane %v735, 1
        %v737 = vadd.f32 %v735, %v736
        %v738 = vadd.f32 %v737, 1e-07
        %v739 = vrcp.pop %v738
        %v740 = vmul.f32 %v738, %v739
        %v741 = vsub.f32 1.0, %v740
        %v742 = vmul.f32 %v739, %v741
        %v743 = vadd.f32 %v739, %v742
        %vm744 = vweird.f32 %v738
        %vm745 = vweird.f32 %v739
        %vm746 = vmor %vm744, %vm745
        %v747 = vsel %vm746, %v739, %v743
        %v748 = vand.u32 2147483647, %v738
        %vm749 = vcmp.eq.f32.partialorder %v748, 8.507059e+37
        %v750 = vand.u32 %v738, 2147483648
        %v751 = vor.u32 1.1754944e-38, %v750
        %v752 = vsel %vm749, %v751, %v747
        %v753 = vmul.f32 %v458, %v752
        %754 = vxpose.xlu0.b32.start [1/16] %v753, 128
        %755 = vxpose.xlu0.b32.cont [2/16] 0.0, 128
        %756 = vxpose.xlu0.b32.cont [3/16] 0.0, 128
        %757 = vxpose.xlu0.b32.cont [4/16] 0.0, 128
        %758 = vxpose.xlu0.b32.cont [5/16] 0.0, 128
        %759 = vxpose.xlu0.b32.cont [6/16] 0.0, 128
        %760 = vxpose.xlu0.b32.cont [7/16] 0.0, 128
        %761 = vxpose.xlu0.b32.cont [8/16] 0.0, 128
        %762 = vxpose.xlu0.b32.cont [9/16] 0.0, 128
        %763 = vxpose.xlu0.b32.cont [10/16] 0.0, 128
        %764 = vxpose.xlu0.b32.cont [11/16] 0.0, 128
        %765 = vxpose.xlu0.b32.cont [12/16] 0.0, 128
        %766 = vxpose.xlu0.b32.cont [13/16] 0.0, 128
        %767 = vxpose.xlu0.b32.cont [14/16] 0.0, 128
        %768 = vxpose.xlu0.b32.cont [15/16] 0.0, 128
        %769 = vxpose.xlu0.b32.end [16/16] 0.0, 128
        %v770 = vpop.trf.xlu0
        %v771 = vpop.trf.xlu0
        %v772 = vpop.trf.xlu0
        %v773 = vpop.trf.xlu0
        %v774 = vpop.trf.xlu0
        %v775 = vpop.trf.xlu0
        %v776 = vpop.trf.xlu0
        %v777 = vpop.trf.xlu0
        %v778 = vpop.trf.xlu0
        %v779 = vpop.trf.xlu0
        %v780 = vpop.trf.xlu0
        %v781 = vpop.trf.xlu0
        %v782 = vpop.trf.xlu0
        %v783 = vpop.trf.xlu0
        %v784 = vpop.trf.xlu0
        %v785 = vpop.trf.xlu0
        %v787 = vsel %vm730, %v770, 0
        %789 = vmatpush.msra.mxu0 0.0
        %790 = vmatpush.msra.mxu0 0.0
        %791 = vmatpush.msra.mxu0 0.0
        %792 = vmatpush.msra.mxu0 0.0
        %793 = vmatpush.msra.mxu0 0.0
        %794 = vmatpush.msra.mxu0 0.0
        %795 = vmatpush.msra.mxu0 0.0
        %796 = vmatpush.msra.mxu0 0.0
        %797 = vmatpush.msra.mxu0 0.0
        %798 = vmatpush.msra.mxu0 0.0
        %799 = vmatpush.msra.mxu0 0.0
        %800 = vmatpush.msra.mxu0 0.0
        %801 = vmatpush.msra.mxu0 0.0
        %802 = vmatpush.msra.mxu0 0.0
        %803 = vmatpush.msra.mxu0 0.0
        %804 = vmatpush.msra.mxu0 %v607
        %805 = vmatmul.f32.gmra.mxu0 %v787
        %v806 = vpop.f32.mrf.mxu0
        %v807 = vadd.f32 0.0, %v806
        %808 = vdwg.mxu0
        %v809 = vadd.f32 %v455, %v807
        %810 = vst [vmem:[%s420] sm:$0xff] %v809
        %811 = vadd.xlane.f32.xlu0 %v731
        %v812 = vpop.xlane.xlu0 %811
        %v813 = vadd.f32 %v812, 1e-07
        %v814 = vrcp.pop %v813
        %v815 = vmul.f32 %v813, %v814
        %v816 = vsub.f32 1.0, %v815
        %v817 = vmul.f32 %v814, %v816
        %v818 = vadd.f32 %v814, %v817
        %vm819 = vweird.f32 %v813
        %vm820 = vweird.f32 %v814
        %vm821 = vmor %vm819, %vm820
        %v822 = vsel %vm821, %v814, %v818
        %v823 = vand.u32 2147483647, %v813
        %vm824 = vcmp.eq.f32.partialorder %v823, 8.507059e+37
        %v825 = vand.u32 %v813, 2147483648
        %v826 = vor.u32 1.1754944e-38, %v825
        %v827 = vsel %vm824, %v826, %v822
        %v828 = vmul.f32 %v458, %v827
        %v829 = vsel %vm730, %v459, 0.0
        %830 = vadd.xlane.f32.xlu0 %v829
        %v831 = vpop.xlane.xlu0 %830
        %v832 = vadd.f32 %v831, 1e-07
        %v833 = vrcp.pop %v832
        %v834 = vmul.f32 %v832, %v833
        %v835 = vsub.f32 1.0, %v834
        %v836 = vmul.f32 %v833, %v835
        %v837 = vadd.f32 %v833, %v836
        %vm838 = vweird.f32 %v832
        %vm839 = vweird.f32 %v833
        %vm840 = vmor %vm838, %vm839
        %v841 = vsel %vm840, %v833, %v837
        %v842 = vand.u32 2147483647, %v832
        %vm843 = vcmp.eq.f32.partialorder %v842, 8.507059e+37
        %v844 = vand.u32 %v832, 2147483648
        %v845 = vor.u32 1.1754944e-38, %v844
        %v846 = vsel %vm843, %v845, %v841
        %v847 = vmul.f32 %v459, %v846
        %v849 = vsel %vm730, %v847, 0
        %851 = vmatpush.msra.mxu0 0.0
        %852 = vmatpush.msra.mxu0 0.0
        %853 = vmatpush.msra.mxu0 0.0
        %854 = vmatpush.msra.mxu0 0.0
        %855 = vmatpush.msra.mxu0 0.0
        %856 = vmatpush.msra.mxu0 0.0
        %857 = vmatpush.msra.mxu0 0.0
        %858 = vmatpush.msra.mxu0 0.0
        %859 = vmatpush.msra.mxu0 0.0
        %860 = vmatpush.msra.mxu0 0.0
        %861 = vmatpush.msra.mxu0 0.0
        %862 = vmatpush.msra.mxu0 0.0
        %863 = vmatpush.msra.mxu0 0.0
        %864 = vmatpush.msra.mxu0 0.0
        %865 = vmatpush.msra.mxu0 0.0
        %866 = vmatpush.msra.mxu0 %v608
        %867 = vmatmul.f32.gmra.mxu0 %v849
        %v868 = vpop.f32.mrf.mxu0
        %v869 = vadd.f32 0.0, %v868
        %870 = vdwg.mxu0
        %vm871 = vcmask 130048
        %v872 = vsel %vm871, %v460, 0.0
        %873 = vadd.xlane.f32.xlu0 %v872
        %v874 = vpop.xlane.xlu0 %873
        %v875 = vadd.f32 %v874, 1e-07
        %v876 = vrcp.pop %v875
        %v877 = vmul.f32 %v875, %v876
        %v878 = vsub.f32 1.0, %v877
        %v879 = vmul.f32 %v876, %v878
        %v880 = vadd.f32 %v876, %v879
        %vm881 = vweird.f32 %v875
        %vm882 = vweird.f32 %v876
        %vm883 = vmor %vm881, %vm882
        %v884 = vsel %vm883, %v876, %v880
        %v885 = vand.u32 2147483647, %v875
        %vm886 = vcmp.eq.f32.partialorder %v885, 8.507059e+37
        %v887 = vand.u32 %v875, 2147483648
        %v888 = vor.u32 1.1754944e-38, %v887
        %v889 = vsel %vm886, %v888, %v884
        %v890 = vmul.f32 %v460, %v889
        %v892 = vsel %vm871, %v890, 0
        %894 = vmatpush.msra.mxu0 0.0
        %895 = vmatpush.msra.mxu0 0.0
        %896 = vmatpush.msra.mxu0 0.0
        %897 = vmatpush.msra.mxu0 0.0
        %898 = vmatpush.msra.mxu0 0.0
        %899 = vmatpush.msra.mxu0 0.0
        %900 = vmatpush.msra.mxu0 0.0
        %901 = vmatpush.msra.mxu0 0.0
        %902 = vmatpush.msra.mxu0 0.0
        %903 = vmatpush.msra.mxu0 0.0
        %904 = vmatpush.msra.mxu0 0.0
        %905 = vmatpush.msra.mxu0 0.0
        %906 = vmatpush.msra.mxu0 0.0
        %907 = vmatpush.msra.mxu0 0.0
        %908 = vmatpush.msra.mxu0 %v691
        %909 = vmatpush.msra.mxu0 %v689
        %910 = vmatmul.f32.gmra.mxu0 %v892
        %v911 = vpop.f32.mrf.mxu0
        %v912 = vadd.f32 0.0, %v911
        %913 = vdwg.mxu0
        %v914 = vsel %vm871, %v462, 0.0
        %915 = vadd.xlane.f32.xlu0 %v914
        %v916 = vpop.xlane.xlu0 %915
        %v917 = vadd.f32 %v916, 1e-07
        %v918 = vrcp.pop %v917
        %v919 = vmul.f32 %v917, %v918
        %v920 = vsub.f32 1.0, %v919
        %v921 = vmul.f32 %v918, %v920
        %v922 = vadd.f32 %v918, %v921
        %vm923 = vweird.f32 %v917
        %vm924 = vweird.f32 %v918
        %vm925 = vmor %vm923, %vm924
        %v926 = vsel %vm925, %v918, %v922
        %v927 = vand.u32 2147483647, %v917
        %vm928 = vcmp.eq.f32.partialorder %v927, 8.507059e+37
        %v929 = vand.u32 %v917, 2147483648
        %v930 = vor.u32 1.1754944e-38, %v929
        %v931 = vsel %vm928, %v930, %v926
        %v932 = vmul.f32 %v462, %v931
        %v934 = vsel %vm871, %v932, 0
        %936 = vmatpush.msra.mxu0 0.0
        %937 = vmatpush.msra.mxu0 0.0
        %938 = vmatpush.msra.mxu0 0.0
        %939 = vmatpush.msra.mxu0 0.0
        %940 = vmatpush.msra.mxu0 0.0
        %941 = vmatpush.msra.mxu0 0.0
        %942 = vmatpush.msra.mxu0 0.0
        %943 = vmatpush.msra.mxu0 0.0
        %944 = vmatpush.msra.mxu0 0.0
        %945 = vmatpush.msra.mxu0 0.0
        %946 = vmatpush.msra.mxu0 0.0
        %947 = vmatpush.msra.mxu0 0.0
        %948 = vmatpush.msra.mxu0 0.0
        %949 = vmatpush.msra.mxu0 0.0
        %950 = vmatpush.msra.mxu0 %v692
        %951 = vmatpush.msra.mxu0 %v690
        %952 = vmatmul.f32.gmra.mxu0 %v934
        %v953 = vpop.f32.mrf.mxu0
        %v954 = vadd.f32 0.0, %v953
        %955 = vdwg.mxu0
        %v957 = vsel %vm730, %v828, 0
        %959 = vmatpush.msra.mxu0 0.0
        %960 = vmatpush.msra.mxu0 0.0
        %961 = vmatpush.msra.mxu0 0.0
        %962 = vmatpush.msra.mxu0 0.0
        %963 = vmatpush.msra.mxu0 0.0
        %964 = vmatpush.msra.mxu0 0.0
        %965 = vmatpush.msra.mxu0 0.0
        %966 = vmatpush.msra.mxu0 0.0
        %967 = vmatpush.msra.mxu0 0.0
        %968 = vmatpush.msra.mxu0 0.0
        %969 = vmatpush.msra.mxu0 0.0
        %970 = vmatpush.msra.mxu0 0.0
        %971 = vmatpush.msra.mxu0 0.0
        %972 = vmatpush.msra.mxu0 0.0
        %973 = vmatpush.msra.mxu0 0.0
        %974 = vmatpush.msra.mxu0 %v729
        %975 = vmatmul.f32.gmra.mxu0 %v957
        %v976 = vpop.f32.mrf.mxu0
        %v977 = vadd.f32 %v869, %v976
        %978 = vdwg.mxu0
        %v979 = vadd.f32 %v977, %v912
        %v980 = vadd.f32 %v979, %v954
        %v981 = vmul.f32 %v980, 0.25
        %v982 = vadd.f32 %v454, %v981
        %983 = vst [vmem:[%s413] sm:$0xff] %v982
        %v984 = vrot.slane %v872, 4
        %v985 = vadd.f32 %v872, %v984
        %v986 = vrot.slane %v985, 2
        %v987 = vadd.f32 %v985, %v986
        %v988 = vrot.slane %v987, 1
        %v989 = vadd.f32 %v987, %v988
        %v990 = vadd.f32 %v989, 1e-07
        %v991 = vrcp.pop %v990
        %v992 = vmul.f32 %v990, %v991
        %v993 = vsub.f32 1.0, %v992
        %v994 = vmul.f32 %v991, %v993
        %v995 = vadd.f32 %v991, %v994
        %vm996 = vweird.f32 %v990
        %vm997 = vweird.f32 %v991
        %vm998 = vmor %vm996, %vm997
        %v999 = vsel %vm998, %v991, %v995
        %v1000 = vand.u32 2147483647, %v990
        %vm1001 = vcmp.eq.f32.partialorder %v1000, 8.507059e+37
        %v1002 = vand.u32 %v990, 2147483648
        %v1003 = vor.u32 1.1754944e-38, %v1002
        %v1004 = vsel %vm1001, %v1003, %v999
        %v1005 = vmul.f32 %v460, %v1004
        %v1006 = vrot.slane %v914, 4
        %v1007 = vadd.f32 %v914, %v1006
        %v1008 = vrot.slane %v1007, 2
        %v1009 = vadd.f32 %v1007, %v1008
        %v1010 = vrot.slane %v1009, 1
        %v1011 = vadd.f32 %v1009, %v1010
        %v1012 = vadd.f32 %v1011, 1e-07
        %v1013 = vrcp.pop %v1012
        %v1014 = vmul.f32 %v1012, %v1013
        %v1015 = vsub.f32 1.0, %v1014
        %v1016 = vmul.f32 %v1013, %v1015
        %v1017 = vadd.f32 %v1013, %v1016
        %vm1018 = vweird.f32 %v1012
        %vm1019 = vweird.f32 %v1013
        %vm1020 = vmor %vm1018, %vm1019
        %v1021 = vsel %vm1020, %v1013, %v1017
        %v1022 = vand.u32 2147483647, %v1012
        %vm1023 = vcmp.eq.f32.partialorder %v1022, 8.507059e+37
        %v1024 = vand.u32 %v1012, 2147483648
        %v1025 = vor.u32 1.1754944e-38, %v1024
        %v1026 = vsel %vm1023, %v1025, %v1021
        %v1027 = vmul.f32 %v462, %v1026
        %1028 = vxpose.xlu0.b32.start [1/16] %v1027, 128
        %1029 = vxpose.xlu0.b32.cont [2/16] 0.0, 128
        %1030 = vxpose.xlu0.b32.cont [3/16] 0.0, 128
        %1031 = vxpose.xlu0.b32.cont [4/16] 0.0, 128
        %1032 = vxpose.xlu0.b32.cont [5/16] 0.0, 128
        %1033 = vxpose.xlu0.b32.cont [6/16] 0.0, 128
        %1034 = vxpose.xlu0.b32.cont [7/16] 0.0, 128
        %1035 = vxpose.xlu0.b32.cont [8/16] 0.0, 128
        %1036 = vxpose.xlu0.b32.cont [9/16] 0.0, 128
        %1037 = vxpose.xlu0.b32.cont [10/16] 0.0, 128
        %1038 = vxpose.xlu0.b32.cont [11/16] 0.0, 128
        %1039 = vxpose.xlu0.b32.cont [12/16] 0.0, 128
        %1040 = vxpose.xlu0.b32.cont [13/16] 0.0, 128
        %1041 = vxpose.xlu0.b32.cont [14/16] 0.0, 128
        %1042 = vxpose.xlu0.b32.cont [15/16] 0.0, 128
        %1043 = vxpose.xlu0.b32.end [16/16] 0.0, 128
        %v1044 = vpop.trf.xlu0
        %v1045 = vpop.trf.xlu0
        %v1046 = vpop.trf.xlu0
        %v1047 = vpop.trf.xlu0
        %v1048 = vpop.trf.xlu0
        %v1049 = vpop.trf.xlu0
        %v1050 = vpop.trf.xlu0
        %v1051 = vpop.trf.xlu0
        %v1052 = vpop.trf.xlu0
        %v1053 = vpop.trf.xlu0
        %v1054 = vpop.trf.xlu0
        %v1055 = vpop.trf.xlu0
        %v1056 = vpop.trf.xlu0
        %v1057 = vpop.trf.xlu0
        %v1058 = vpop.trf.xlu0
        %v1059 = vpop.trf.xlu0
        %v1061 = vsel %vm730, %v1044, 0
        %v1064 = vsel %vm730, %v1045, 0
        %1066 = vmatpush.msra.mxu0 0.0
        %1067 = vmatpush.msra.mxu0 0.0
        %1068 = vmatpush.msra.mxu0 0.0
        %1069 = vmatpush.msra.mxu0 0.0
        %1070 = vmatpush.msra.mxu0 0.0
        %1071 = vmatpush.msra.mxu0 0.0
        %1072 = vmatpush.msra.mxu0 0.0
        %1073 = vmatpush.msra.mxu0 0.0
        %1074 = vmatpush.msra.mxu0 0.0
        %1075 = vmatpush.msra.mxu0 0.0
        %1076 = vmatpush.msra.mxu0 0.0
        %1077 = vmatpush.msra.mxu0 0.0
        %1078 = vmatpush.msra.mxu0 0.0
        %1079 = vmatpush.msra.mxu0 0.0
        %1080 = vmatpush.msra.mxu0 0.0
        %1081 = vmatpush.msra.mxu0 %v610
        %1082 = vmatmul.f32.gmra.mxu0 %v1061
        %v1083 = vpop.f32.mrf.mxu0
        %v1084 = vadd.f32 0.0, %v1083
        %1085 = vmatmul.f32.gmra.mxu0 %v1064
        %v1086 = vpop.f32.mrf.mxu0
        %v1087 = vadd.f32 0.0, %v1086
        %1088 = vdwg.mxu0
        %1089 = vxpose.xlu0.b32.start [1/16] %v1005, 128
        %1090 = vxpose.xlu0.b32.cont [2/16] 0.0, 128
        %1091 = vxpose.xlu0.b32.cont [3/16] 0.0, 128
        %1092 = vxpose.xlu0.b32.cont [4/16] 0.0, 128
        %1093 = vxpose.xlu0.b32.cont [5/16] 0.0, 128
        %1094 = vxpose.xlu0.b32.cont [6/16] 0.0, 128
        %1095 = vxpose.xlu0.b32.cont [7/16] 0.0, 128
        %1096 = vxpose.xlu0.b32.cont [8/16] 0.0, 128
        %1097 = vxpose.xlu0.b32.cont [9/16] 0.0, 128
        %1098 = vxpose.xlu0.b32.cont [10/16] 0.0, 128
        %1099 = vxpose.xlu0.b32.cont [11/16] 0.0, 128
        %1100 = vxpose.xlu0.b32.cont [12/16] 0.0, 128
        %1101 = vxpose.xlu0.b32.cont [13/16] 0.0, 128
        %1102 = vxpose.xlu0.b32.cont [14/16] 0.0, 128
        %1103 = vxpose.xlu0.b32.cont [15/16] 0.0, 128
        %1104 = vxpose.xlu0.b32.end [16/16] 0.0, 128
        %v1105 = vpop.trf.xlu0
        %v1106 = vpop.trf.xlu0
        %v1107 = vpop.trf.xlu0
        %v1108 = vpop.trf.xlu0
        %v1109 = vpop.trf.xlu0
        %v1110 = vpop.trf.xlu0
        %v1111 = vpop.trf.xlu0
        %v1112 = vpop.trf.xlu0
        %v1113 = vpop.trf.xlu0
        %v1114 = vpop.trf.xlu0
        %v1115 = vpop.trf.xlu0
        %v1116 = vpop.trf.xlu0
        %v1117 = vpop.trf.xlu0
        %v1118 = vpop.trf.xlu0
        %v1119 = vpop.trf.xlu0
        %v1120 = vpop.trf.xlu0
        %v1122 = vsel %vm730, %v1105, 0
        %v1125 = vsel %vm730, %v1106, 0
        %1127 = vmatpush.msra.mxu0 0.0
        %1128 = vmatpush.msra.mxu0 0.0
        %1129 = vmatpush.msra.mxu0 0.0
        %1130 = vmatpush.msra.mxu0 0.0
        %1131 = vmatpush.msra.mxu0 0.0
        %1132 = vmatpush.msra.mxu0 0.0
        %1133 = vmatpush.msra.mxu0 0.0
        %1134 = vmatpush.msra.mxu0 0.0
        %1135 = vmatpush.msra.mxu0 0.0
        %1136 = vmatpush.msra.mxu0 0.0
        %1137 = vmatpush.msra.mxu0 0.0
        %1138 = vmatpush.msra.mxu0 0.0
        %1139 = vmatpush.msra.mxu0 0.0
        %1140 = vmatpush.msra.mxu0 0.0
        %1141 = vmatpush.msra.mxu0 0.0
        %1142 = vmatpush.msra.mxu0 %v609
        %1143 = vmatmul.f32.gmra.mxu0 %v1122
        %v1144 = vpop.f32.mrf.mxu0
        %v1145 = vadd.f32 %v1084, %v1144
        %1146 = vmatmul.f32.gmra.mxu0 %v1125
        %v1147 = vpop.f32.mrf.mxu0
        %v1148 = vadd.f32 %v1087, %v1147
        %1149 = vdwg.mxu0
        %v1150 = vmul.f32 %v1145, 0.5
        %v1151 = vmul.f32 %v1148, 0.5
        %v1152 = vadd.f32 %v456, %v1150
        %v1153 = vadd.f32 %v457, %v1151
        %1154 = vst [vmem:[%s427] sm:$0xff] %v1152
        %1155 = vst [vmem:[%s427 + $0x8] sm:$0xff] %v1153
        %s1156 = sand.u32 %s213, 1
        %s1157 = scalar_lea.sflag [#allocation4], %s1156
        %s1158 = sand.u32 %s213, 1
        %s1159 = smul.addr %s1158, 8
        %s1160 = scalar_lea.vmem [#allocation5], %s1159
        %s1161 = sand.u32 %s28, 1
        %s1162 = scalar_lea.sflag [#allocation7], %s1161
        %s1163 = sand.u32 %s239, 1
        %s1164 = smul.addr %s1163, 8
        %s1165 = scalar_lea.vmem [#allocation6], %s1164
        %s1166 = sand.u32 %s28, 1
        %s1167 = scalar_lea.sflag [#allocation7], %s1166
        %s1168 = sand.u32 %s265, 1
        %s1169 = smul.addr %s1168, 16
        %s1170 = scalar_lea.vmem [#allocation8], %s1169
        // Predicated region
        $region53: #{graph_conv_layer.1} parent=47 // pred_check
          %p1171 = pneg %p223
        $region54: #{graph_conv_layer.1} parent=47 // pred_check_branch
          %1173 = sbr.rel (%p1171) target = $region56
        $region55: #{graph_conv_layer.1} parent=47 // pred_region
          %1175 = vsyncadd %s1157, 0
          %s1176 = smul.addr %s28, 8
          %s1177 = scalar_lea.hbm %s7, %s1176
          %s1179 = sshll.u32 %s1160, 4
          %s1180 = int_to_ptr.vmem [resolvable:$true] %s1179
          %s1181 = sshll.u32 %s1177, 4
          %s1182 = int_to_ptr.hbm [resolvable:$true] %s1181
          %1184 = dma.vmem_to_hbm [thread:$0]  %s1180, 128, %s1182, %s1157
        $region56: #{graph_conv_layer.1} parent=47 // pred_fallthru
          _
        // Predicated region
        $region57: #{graph_conv_layer.1} parent=47 // pred_check
          %p1185 = pneg %p249
        $region58: #{graph_conv_layer.1} parent=47 // pred_check_branch
          %1187 = sbr.rel (%p1185) target = $region60
        $region59: #{graph_conv_layer.1} parent=47 // pred_region
          %1189 = vsyncadd %s1162, 0
          %s1190 = smul.addr %s28, 8
          %s1191 = scalar_lea.hbm %s8, %s1190
          %s1193 = sshll.u32 %s1165, 4
          %s1194 = int_to_ptr.vmem [resolvable:$true] %s1193
          %s1195 = sshll.u32 %s1191, 4
          %s1196 = int_to_ptr.hbm [resolvable:$true] %s1195
          %1198 = dma.vmem_to_hbm [thread:$0]  %s1194, 128, %s1196, %s1162
        $region60: #{graph_conv_layer.1} parent=47 // pred_fallthru
          _
        // Predicated region
        $region61: #{graph_conv_layer.1} parent=47 // pred_check
          %p1199 = pneg %p275
        $region62: #{graph_conv_layer.1} parent=47 // pred_check_branch
          %1201 = sbr.rel (%p1199) target = $region64
        $region63: #{graph_conv_layer.1} parent=47 // pred_region
          %1203 = vsyncadd %s1167, 0
          %s1204 = smul.addr %s28, 2
          %s1205 = smul.addr %s1204, 8
          %s1206 = scalar_lea.hbm %s9, %s1205
          %s1207 = sshll.u32 %s1170, 4
          %s1208 = int_to_ptr.vmem [resolvable:$true] %s1207
          %s1209 = sshll.u32 %s1206, 4
          %s1210 = int_to_ptr.hbm [resolvable:$true] %s1209
          %1215 = dma.vmem_to_hbm [thread:$0]  %s1208, 256, %s1210, %s1167, 128, 128, 8
        $region64: #{graph_conv_layer.1} parent=47 // pred_fallthru
          _
      $region48: #{graph_conv_layer.1} parent=5 // pred_fallthru
        _
      %p1216 = scmp.le.s32.totalorder 2, %s23
      // Predicated region
      $region65: #{graph_conv_layer.1} parent=5 // pred_check
        %p1217 = pneg %p1216
      $region66: #{graph_conv_layer.1} parent=5 // pred_check_branch
        %1219 = sbr.rel (%p1217) target = $region68
      $region67: #{graph_conv_layer.1} parent=5 // pred_region
        %s1220 = ssub.s32 %s23, 2
        // Predicated region
        $region69: #{graph_conv_layer.1} parent=67 // pred_check
          %p1221 = pneg %p229
        $region70: #{graph_conv_layer.1} parent=67 // pred_check_branch
          %1223 = sbr.rel (%p1221) target = $region72
        $region71: #{graph_conv_layer.1} parent=67 // pred_region
          %s1224 = sand.u32 %s214, 1
          %s1225 = scalar_lea.sflag [#allocation4], %s1224
          %s1226 = sand.u32 %s214, 1
          %s1227 = smul.addr %s1226, 8
          %s1228 = scalar_lea.vmem [#allocation5], %s1227
          %1230 = dma.done %s1225, 128
        $region72: #{graph_conv_layer.1} parent=67 // pred_fallthru
          _
        // Predicated region
        $region73: #{graph_conv_layer.1} parent=67 // pred_check
          %p1231 = pneg %p255
        $region74: #{graph_conv_layer.1} parent=67 // pred_check_branch
          %1233 = sbr.rel (%p1231) target = $region76
        $region75: #{graph_conv_layer.1} parent=67 // pred_region
          %s1234 = sand.u32 %s29, 1
          %s1235 = scalar_lea.sflag [#allocation7], %s1234
          %s1236 = sand.u32 %s240, 1
          %s1237 = smul.addr %s1236, 8
          %s1238 = scalar_lea.vmem [#allocation6], %s1237
          %1240 = dma.done %s1235, 128
        $region76: #{graph_conv_layer.1} parent=67 // pred_fallthru
          _
        // Predicated region
        $region77: #{graph_conv_layer.1} parent=67 // pred_check
          %p1241 = pneg %p281
        $region78: #{graph_conv_layer.1} parent=67 // pred_check_branch
          %1243 = sbr.rel (%p1241) target = $region80
        $region79: #{graph_conv_layer.1} parent=67 // pred_region
          %s1244 = sand.u32 %s29, 1
          %s1245 = scalar_lea.sflag [#allocation7], %s1244
          %s1246 = sand.u32 %s266, 1
          %s1247 = smul.addr %s1246, 16
          %s1248 = scalar_lea.vmem [#allocation8], %s1247
          %1250 = dma.done %s1245, 256
        $region80: #{graph_conv_layer.1} parent=67 // pred_fallthru
          _
      $region68: #{graph_conv_layer.1} parent=5 // pred_fallthru
        _
    $region6: #{graph_conv_layer.1} parent=1 // loop_footer
      %s27 = sadd.s32 1, %s23
    $region7: #{graph_conv_layer.1} parent=1 // loop_footer_branch
      %22 = sbr.rel target = $region3
    $region8: #{graph_conv_layer.1} parent=1 // loop_exit
      _
    %1251 = vsyncpa [#allocation3], 1
    %s1252 = scalar_lea.sflag [#allocation3], 1
    %1253 = vsyncpa %s1252, 1
    %1254 = vsyncpa [#allocation4], 1
    %s1255 = scalar_lea.sflag [#allocation4], 1
    %1256 = vsyncpa %s1255, 1
    %1257 = vsyncpa [#allocation7], 1
    %s1258 = scalar_lea.sflag [#allocation7], 1
    %1259 = vsyncpa %s1258, 1

</llo_original>
